<compile_context>
chip_gen: v5e
topology: v5e:2x2
jax: 0.10.0
libtpu: 0.0.40
codegen_flags: <defaults>
</compile_context>

<pallas_src>
import jax
import jax.numpy as jnp
from jax import lax
from jax.experimental import pallas as pl
from jax.experimental.pallas import tpu as pltpu

NEG_SLOPE = 0.01      # F.leaky_relu default negative_slope
NEG_BIG = -1e30       # segment-max identity (finite: avoids 0 * inf = NaN in gathers)


def _round_up(a: int, b: int) -> int:
    return (a + b - 1) // b * b


def gat_r_kernel(idx_i_ref, idx_j_ref, s_ref, x_ref, out_ref,
                 m_ref, l_ref, acc_ref):
    """Grid = (3 phases, E-blocks); E-blocks iterate fastest.

    phase 0: m[j]  = max_{e: idx_j==j} leaky_relu(e)        (running max)
    phase 1: l[j]  = sum_{e: idx_j==j} exp(e - m[j])
    phase 2: out[i] += exp(e - m[j]) / l[j] * x[j] ; relu + writeback at end
    """
    phase = pl.program_id(0)
    eb = pl.program_id(1)
    last_eb = pl.num_programs(1) - 1

    te = idx_i_ref.shape[0]
    n_pad = x_ref.shape[0]

    # ---- init persistent accumulators on the very first grid step ----------
    @pl.when(jnp.logical_and(phase == 0, eb == 0))
    def _init():
        m_ref[...] = jnp.full_like(m_ref, NEG_BIG)
        l_ref[...] = jnp.zeros_like(l_ref)
        acc_ref[...] = jnp.zeros_like(acc_ref)

    # ---- one-hot gather/scatter tiles built on the fly (never touch HBM) ---
    col = lax.broadcasted_iota(jnp.int32, (te, n_pad), 1)
    pj_mask = idx_j_ref[...] == col                       # [TE, N_pad] bool
    pj = pj_mask.astype(jnp.float32)                      # source one-hot
    pi = (idx_i_ref[...] == col).astype(jnp.float32)      # target one-hot

    # ---- per-edge scores via packed lane-dense RHS (cols 0/1 = s_i/s_j) ----
    g_i = jnp.dot(pi, s_ref[...], preferred_element_type=jnp.float32)  # [TE,128]
    g_j = jnp.dot(pj, s_ref[...], preferred_element_type=jnp.float32)  # [TE,128]
    e = g_i[:, 0:1] + g_j[:, 1:2]                                      # [TE,1]
    e = jnp.where(e > 0, e, NEG_SLOPE * e)                             # leaky_relu

    # ---- phase 0: running per-segment max ([1, N_pad] accumulator only) ----
    @pl.when(phase == 0)
    def _seg_max():
        masked = jnp.where(pj_mask, e, NEG_BIG)              # [TE, N_pad] (tile-local)
        tile_max = jnp.max(masked, axis=0, keepdims=True)    # [1, N_pad]
        m_ref[...] = jnp.maximum(m_ref[...], tile_max)

    # ---- phase 1: per-segment sum of exp(e - m) -----------------------------
    @pl.when(phase == 1)
    def _seg_sum():
        m_pe = lax.dot_general(pj, m_ref[...], (((1,), (1,)), ((), ())),
                               preferred_element_type=jnp.float32)     # [TE,1]
        p = jnp.exp(e - m_pe)
        l_ref[...] += lax.dot_general(pj, p, (((0,), (0,)), ((), ())),
                                      preferred_element_type=jnp.float32)  # [N_pad,1]

    # ---- phase 2: alpha + weighted scatter-add into the VMEM accumulator ----
    @pl.when(phase == 2)
    def _aggregate():
        m_pe = lax.dot_general(pj, m_ref[...], (((1,), (1,)), ((), ())),
                               preferred_element_type=jnp.float32)     # [TE,1]
        l_pe = jnp.dot(pj, l_ref[...], preferred_element_type=jnp.float32)  # [TE,1]
        alpha = jnp.exp(e - m_pe) / (l_pe + 1e-16)                     # [TE,1]
        msg = jnp.dot(pj, x_ref[...], preferred_element_type=jnp.float32)   # [TE,H]
        acc_ref[...] += lax.dot_general(pi, alpha * msg,
                                        (((0,), (0,)), ((), ())),
                                        preferred_element_type=jnp.float32)  # [N,H]

    # ---- finalize: relu + single lane-dense writeback ------------------------
    @pl.when(jnp.logical_and(phase == 2, eb == last_eb))
    def _finalize():
        out_ref[...] = jnp.maximum(acc_ref[...], 0.0).astype(out_ref.dtype)


def gat_r_forward(x, edge_index, w_i, w_j, line_graph_val=None, *, edge_tile=256):
    """Pallas implementation of GAT_R.forward.

    x          : [N, H] float node features
    edge_index : [2, E] int32; row 0 = edge_index_j (source / softmax segment),
                               row 1 = edge_index_i (target)
    w_i, w_j   : [1, H] weights of nn.Linear(hidden, 1, bias=False)
    line_graph_val is accepted but unused (the reference forward never reads it).
    """
    del line_graph_val
    N, H = x.shape
    E = edge_index.shape[1]

    te = _round_up(min(edge_tile, max(E, 1)), 128)     # edge-tile (multiple of 128)
    e_pad = _round_up(max(E, 1), te)
    n_pad = _round_up(N + 1, 128)                      # +1 dummy node absorbs padded edges
    h_pad = _round_up(H, 128)                          # lane-dense output / matmuls
    num_eb = e_pad // te

    xf = x.astype(jnp.float32)
    idx_j = edge_index[0].astype(jnp.int32)
    idx_i = edge_index[1].astype(jnp.int32)

    # Padded edges point at the dummy node N (zero features, rows discarded).
    idx_i_p = jnp.full((e_pad, 1), N, dtype=jnp.int32).at[:E, 0].set(idx_i)
    idx_j_p = jnp.full((e_pad, 1), N, dtype=jnp.int32).at[:E, 0].set(idx_j)

    # Hoisted trivial score matmul, packed into a lane-dense [N_pad, 128] RHS:
    # column 0 = a_i(x), column 1 = a_j(x), rest zero.
    s_i = xf @ w_i.astype(jnp.float32).T               # [N, 1]
    s_j = xf @ w_j.astype(jnp.float32).T               # [N, 1]
    s_pack = jnp.zeros((n_pad, 128), jnp.float32)
    s_pack = s_pack.at[:N, 0:1].set(s_i).at[:N, 1:2].set(s_j)

    x_pad = jnp.zeros((n_pad, h_pad), jnp.float32).at[:N, :H].set(xf)

    # ---- cost / VMEM hints ---------------------------------------------------
    macs = num_eb * te * n_pad * (3 * 2 * 128   # score gathers (recomputed x3 phases)
                                  + 2 * 1       # m gathers (phases 1, 2)
                                  + 1 + 1       # l scatter + l gather
                                  + 2 * h_pad)  # x gather + output scatter
    cost = pl.CostEstimate(
        flops=2 * macs,
        transcendentals=2 * e_pad,
        bytes_accessed=(3 * 2 * e_pad * 4 + n_pad * 128 * 4 + 2 * n_pad * h_pad * 4))

    resident = (3 * n_pad * h_pad * 4            # x, acc scratch, out
                + n_pad * 128 * 4                # packed scores
                + n_pad * 8                      # m + l accumulators
                + 2 * 2 * te * 4)                # double-buffered index tiles
    temps = te * n_pad * 4 * 4 + 2 * te * 128 * 4 + 2 * te * h_pad * 4
    vmem_limit = int(min(48 * 1024 * 1024,       # stay under v7x's 64 MiB physical VMEM
                         max(16 * 1024 * 1024, 2 * (resident + temps))))

    out = pl.pallas_call(
        gat_r_kernel,
        out_shape=jax.ShapeDtypeStruct((n_pad, h_pad), jnp.float32),
        grid_spec=pltpu.PrefetchScalarGridSpec(
            num_scalar_prefetch=0,
            grid=(3, num_eb),
            in_specs=[
                pl.BlockSpec((te, 1), lambda p, e: (e, 0)),         # idx_i tile
                pl.BlockSpec((te, 1), lambda p, e: (e, 0)),         # idx_j tile
                pl.BlockSpec((n_pad, 128), lambda p, e: (0, 0)),    # packed scores
                pl.BlockSpec((n_pad, h_pad), lambda p, e: (0, 0)),  # node features
            ],
            out_specs=pl.BlockSpec((n_pad, h_pad), lambda p, e: (0, 0)),
            scratch_shapes=[
                pltpu.VMEM((1, n_pad), jnp.float32),      # m: running segment max
                pltpu.VMEM((n_pad, 1), jnp.float32),      # l: segment sum of exp
                pltpu.VMEM((n_pad, h_pad), jnp.float32),  # output accumulator
            ],
        ),
        compiler_params=pltpu.CompilerParams(
            dimension_semantics=("arbitrary", "arbitrary"),
            vmem_limit_bytes=vmem_limit,
        ),
        cost_estimate=cost,
    )(idx_i_p, idx_j_p, s_pack, x_pad)

    return out[:N, :H]


def gat_r_reference(x, edge_index, w_i, w_j):
    """Pure-JAX reference mirroring the PyTorch forward semantics."""
    idx_j, idx_i = edge_index[0], edge_index[1]
    N = x.shape[0]
    s_i = (x @ w_i.T)[:, 0]
    s_j = (x @ w_j.T)[:, 0]
    e = s_i[idx_i] + s_j[idx_j]
    e = jnp.where(e > 0, e, NEG_SLOPE * e)
    seg_max = jax.ops.segment_max(e, idx_j, num_segments=N)
    ex = jnp.exp(e - seg_max[idx_j])
    seg_sum = jax.ops.segment_sum(ex, idx_j, num_segments=N)
    alpha = ex / (seg_sum[idx_j] + 1e-16)
    out = jax.ops.segment_sum(alpha[:, None] * x[idx_j], idx_i, num_segments=N)
    return jnp.maximum(out, 0.0)


if __name__ == "__main__":
    key = jax.random.PRNGKey(0)
    N, H, E = 8, 32, 16  # nodes, hidden, edges

    kx, ke, kwi, kwj = jax.random.split(key, 4)
    x = jax.random.normal(kx, (N, H), dtype=jnp.float32)
    edge_index = jax.random.randint(ke, (2, E), 0, N, dtype=jnp.int32)
    # nn.Linear(hidden, 1, bias=False) weight shape is (1, hidden)
    w_i = jax.random.normal(kwi, (1, H), dtype=jnp.float32) * 0.1
    w_j = jax.random.normal(kwj, (1, H), dtype=jnp.float32) * 0.1
    line_graph_val = jnp.zeros((E,), dtype=jnp.float32)  # unused by forward

    out = gat_r_forward(x, edge_index, w_i, w_j, line_graph_val)
    out = jax.block_until_ready(out)

    ref = gat_r_reference(x, edge_index, w_i, w_j)
    assert out.shape == (N, H)
    assert jnp.allclose(out, ref, atol=1e-5, rtol=1e-5), (out, ref)
    print("KERNEL_OK")
</pallas_src>

<mosaic_0001>
module attributes {stable_mosaic.version = 11 : i64} {
  func.func @gat_r_kernel(%arg0: i32, %arg1: i32, %arg2: memref<128x1xi32, #tpu.memory_space<vmem>>, %arg3: memref<128x1xi32, #tpu.memory_space<vmem>>, %arg4: memref<128x128xf32, #tpu.memory_space<vmem>>, %arg5: memref<128x128xf32, #tpu.memory_space<vmem>>, %arg6: memref<128x128xf32, #tpu.memory_space<vmem>>, %arg7: memref<1x128xf32, #tpu.memory_space<vmem>>, %arg8: memref<128x1xf32, #tpu.memory_space<vmem>>, %arg9: memref<128x128xf32, #tpu.memory_space<vmem>>) attributes {dimension_semantics = [#tpu.dimension_semantics<arbitrary>, #tpu.dimension_semantics<arbitrary>], iteration_bounds = array<i64: 3, 1>, scalar_prefetch = 0 : i64, scratch_operands = 3 : i64, tpu.core_type = #tpu.core_type<tc>, window_params = [{transform_indices = @transform_0, window_bounds = array<i64: 128, 1>}, {transform_indices = @transform_1, window_bounds = array<i64: 128, 1>}, {pipeline_mode = #tpu.pipeline_mode<synchronous>, transform_indices = @transform_2, window_bounds = array<i64: 128, 128>}, {pipeline_mode = #tpu.pipeline_mode<synchronous>, transform_indices = @transform_3, window_bounds = array<i64: 128, 128>}, {pipeline_mode = #tpu.pipeline_mode<synchronous>, transform_indices = @transform_4, window_bounds = array<i64: 128, 128>}]} {
    %c0_i32 = arith.constant 0 : i32
    %0 = arith.cmpi eq, %arg0, %c0_i32 : i32
    %c0_i32_0 = arith.constant 0 : i32
    %1 = arith.cmpi eq, %arg1, %c0_i32_0 : i32
    %2 = arith.andi %0, %1 : i1
    %3 = arith.extui %2 : i1 to i32
    %c0_i32_1 = arith.constant 0 : i32
    %4 = arith.cmpi ne, %3, %c0_i32_1 : i32
    scf.if %4 {
      %cst_19 = arith.constant -1.000000e+30 : f32
      %42 = vector.broadcast %cst_19 : f32 to vector<1x128xf32>
      %c0_20 = arith.constant 0 : index
      %c0_21 = arith.constant 0 : index
      %43 = vector.load %arg7[%c0_20, %c0_21] : memref<1x128xf32, #tpu.memory_space<vmem>>, vector<1x128xf32>
      tpu.vector_store %arg7[%c0_20, %c0_21], %42 {strides = array<i32>} : memref<1x128xf32, #tpu.memory_space<vmem>>, vector<1x128xf32>,
      %cst_22 = arith.constant 0.000000e+00 : f32
      %44 = vector.broadcast %cst_22 : f32 to vector<128x1xf32>
      %c0_23 = arith.constant 0 : index
      %c0_24 = arith.constant 0 : index
      %45 = vector.load %arg8[%c0_23, %c0_24] : memref<128x1xf32, #tpu.memory_space<vmem>>, vector<128x1xf32>
      tpu.vector_store %arg8[%c0_23, %c0_24], %44 {strides = array<i32>} : memref<128x1xf32, #tpu.memory_space<vmem>>, vector<128x1xf32>,
      %cst_25 = arith.constant 0.000000e+00 : f32
      %46 = vector.broadcast %cst_25 : f32 to vector<128x128xf32>
      %c0_26 = arith.constant 0 : index
      %c0_27 = arith.constant 0 : index
      %47 = vector.load %arg9[%c0_26, %c0_27] : memref<128x128xf32, #tpu.memory_space<vmem>>, vector<128x128xf32>
      tpu.vector_store %arg9[%c0_26, %c0_27], %46 {strides = array<i32>} : memref<128x128xf32, #tpu.memory_space<vmem>>, vector<128x128xf32>,
    } else {
    }
    %5 = tpu.iota {dimensions = array<i32: 1>} : vector<128x128xi32>
    %c0 = arith.constant 0 : index
    %c0_2 = arith.constant 0 : index
    %6 = vector.load %arg3[%c0, %c0_2] : memref<128x1xi32, #tpu.memory_space<vmem>>, vector<128x1xi32>
    %7 = vector.broadcast %6 : vector<128x1xi32> to vector<128x128xi32>
    %8 = arith.cmpi eq, %7, %5 : vector<128x128xi32>
    %9 = arith.extui %8 : vector<128x128xi1> to vector<128x128xi32>
    %10 = arith.sitofp %9 : vector<128x128xi32> to vector<128x128xf32>
    %c0_3 = arith.constant 0 : index
    %c0_4 = arith.constant 0 : index
    %11 = vector.load %arg2[%c0_3, %c0_4] : memref<128x1xi32, #tpu.memory_space<vmem>>, vector<128x1xi32>
    %12 = vector.broadcast %11 : vector<128x1xi32> to vector<128x128xi32>
    %13 = arith.cmpi eq, %12, %5 : vector<128x128xi32>
    %14 = arith.extui %13 : vector<128x128xi1> to vector<128x128xi32>
    %15 = arith.sitofp %14 : vector<128x128xi32> to vector<128x128xf32>
    %c0_5 = arith.constant 0 : index
    %c0_6 = arith.constant 0 : index
    %16 = vector.load %arg4[%c0_5, %c0_6] : memref<128x128xf32, #tpu.memory_space<vmem>>, vector<128x128xf32>
    %cst = arith.constant dense<0.000000e+00> : vector<128x128xf32>
    %17 = tpu.matmul %15, %16, %cst {dimension_numbers = #tpu.dot_dimension_numbers<[1], [0], [0], [1], [0, 0, 1, 1], [], []>} : vector<128x128xf32>, vector<128x128xf32>, vector<128x128xf32> -> vector<128x128xf32>
    %c0_7 = arith.constant 0 : index
    %c0_8 = arith.constant 0 : index
    %18 = vector.load %arg4[%c0_7, %c0_8] : memref<128x128xf32, #tpu.memory_space<vmem>>, vector<128x128xf32>
    %cst_9 = arith.constant dense<0.000000e+00> : vector<128x128xf32>
    %19 = tpu.matmul %10, %18, %cst_9 {dimension_numbers = #tpu.dot_dimension_numbers<[1], [0], [0], [1], [0, 0, 1, 1], [], []>} : vector<128x128xf32>, vector<128x128xf32>, vector<128x128xf32> -> vector<128x128xf32>
    %20 = vector.extract_strided_slice %17 {offsets = [0, 0], sizes = [128, 1], strides = [1, 1]} : vector<128x128xf32> to vector<128x1xf32>
    %21 = vector.extract_strided_slice %19 {offsets = [0, 1], sizes = [128, 1], strides = [1, 1]} : vector<128x128xf32> to vector<128x1xf32>
    %22 = arith.addf %20, %21 : vector<128x1xf32>
    %cst_10 = arith.constant 0.000000e+00 : f32
    %23 = vector.broadcast %cst_10 : f32 to vector<128x1xf32>
    %24 = arith.cmpf ogt, %22, %23 : vector<128x1xf32>
    %cst_11 = arith.constant 0.00999999977 : f32
    %25 = vector.broadcast %cst_11 : f32 to vector<128x1xf32>
    %26 = arith.mulf %25, %22 : vector<128x1xf32>
    %27 = arith.select %24, %22, %26 : vector<128x1xi1>, vector<128x1xf32>
    %c0_i32_12 = arith.constant 0 : i32
    %28 = arith.cmpi eq, %arg0, %c0_i32_12 : i32
    %29 = arith.extui %28 : i1 to i32
    %c0_i32_13 = arith.constant 0 : i32
    %30 = arith.cmpi ne, %29, %c0_i32_13 : i32
    scf.if %30 {
      %cst_19 = arith.constant -1.000000e+30 : f32
      %42 = vector.shape_cast %27 : vector<128x1xf32> to vector<128x1xf32>
      %43 = vector.broadcast %42 : vector<128x1xf32> to vector<128x128xf32>
      %44 = vector.broadcast %cst_19 : f32 to vector<128x128xf32>
      %45 = arith.select %8, %43, %44 : vector<128x128xi1>, vector<128x128xf32>
      %cst_20 = arith.constant dense<0xFF800000> : vector<128xf32>
      %46 = vector.multi_reduction <maximumf>, %45, %cst_20 [0] : vector<128x128xf32> to vector<128xf32>
      %47 = vector.shape_cast %46 : vector<128xf32> to vector<1x128xf32>
      %c0_21 = arith.constant 0 : index
      %c0_22 = arith.constant 0 : index
      %48 = vector.load %arg7[%c0_21, %c0_22] : memref<1x128xf32, #tpu.memory_space<vmem>>, vector<1x128xf32>
      %49 = arith.maximumf %48, %47 : vector<1x128xf32>
      %c0_23 = arith.constant 0 : index
      %c0_24 = arith.constant 0 : index
      %50 = vector.load %arg7[%c0_23, %c0_24] : memref<1x128xf32, #tpu.memory_space<vmem>>, vector<1x128xf32>
      tpu.vector_store %arg7[%c0_23, %c0_24], %49 {strides = array<i32>} : memref<1x128xf32, #tpu.memory_space<vmem>>, vector<1x128xf32>,
    } else {
    }
    %c1_i32 = arith.constant 1 : i32
    %31 = arith.cmpi eq, %arg0, %c1_i32 : i32
    %32 = arith.extui %31 : i1 to i32
    %c0_i32_14 = arith.constant 0 : i32
    %33 = arith.cmpi ne, %32, %c0_i32_14 : i32
    scf.if %33 {
      %c0_19 = arith.constant 0 : index
      %c0_20 = arith.constant 0 : index
      %42 = vector.load %arg7[%c0_19, %c0_20] : memref<1x128xf32, #tpu.memory_space<vmem>>, vector<1x128xf32>
      %cst_21 = arith.constant dense<0.000000e+00> : vector<128x1xf32>
      %43 = tpu.matmul %10, %42, %cst_21 {dimension_numbers = #tpu.dot_dimension_numbers<[1], [1], [0], [0], [0, 0, 1, 0], [], []>} : vector<128x128xf32>, vector<1x128xf32>, vector<128x1xf32> -> vector<128x1xf32>
      %44 = arith.subf %27, %43 : vector<128x1xf32>
      %45 = math.exp %44 : vector<128x1xf32>
      %c0_22 = arith.constant 0 : index
      %c0_23 = arith.constant 0 : index
      %46 = vector.load %arg8[%c0_22, %c0_23] : memref<128x1xf32, #tpu.memory_space<vmem>>, vector<128x1xf32>
      %cst_24 = arith.constant dense<0.000000e+00> : vector<128x1xf32>
      %47 = tpu.matmul %10, %45, %cst_24 {dimension_numbers = #tpu.dot_dimension_numbers<[0], [0], [1], [1], [0, 1, 1, 1], [], []>} : vector<128x128xf32>, vector<128x1xf32>, vector<128x1xf32> -> vector<128x1xf32>
      %48 = arith.addf %46, %47 : vector<128x1xf32>
      %c0_25 = arith.constant 0 : index
      %c0_26 = arith.constant 0 : index
      %49 = vector.load %arg8[%c0_25, %c0_26] : memref<128x1xf32, #tpu.memory_space<vmem>>, vector<128x1xf32>
      tpu.vector_store %arg8[%c0_25, %c0_26], %48 {strides = array<i32>} : memref<128x1xf32, #tpu.memory_space<vmem>>, vector<128x1xf32>,
    } else {
    }
    %c2_i32 = arith.constant 2 : i32
    %34 = arith.cmpi eq, %arg0, %c2_i32 : i32
    %35 = arith.extui %34 : i1 to i32
    %c0_i32_15 = arith.constant 0 : i32
    %36 = arith.cmpi ne, %35, %c0_i32_15 : i32
    scf.if %36 {
      %c0_19 = arith.constant 0 : index
      %c0_20 = arith.constant 0 : index
      %42 = vector.load %arg7[%c0_19, %c0_20] : memref<1x128xf32, #tpu.memory_space<vmem>>, vector<1x128xf32>
      %cst_21 = arith.constant dense<0.000000e+00> : vector<128x1xf32>
      %43 = tpu.matmul %10, %42, %cst_21 {dimension_numbers = #tpu.dot_dimension_numbers<[1], [1], [0], [0], [0, 0, 1, 0], [], []>} : vector<128x128xf32>, vector<1x128xf32>, vector<128x1xf32> -> vector<128x1xf32>
      %c0_22 = arith.constant 0 : index
      %c0_23 = arith.constant 0 : index
      %44 = vector.load %arg8[%c0_22, %c0_23] : memref<128x1xf32, #tpu.memory_space<vmem>>, vector<128x1xf32>
      %cst_24 = arith.constant dense<0.000000e+00> : vector<128x1xf32>
      %45 = tpu.matmul %10, %44, %cst_24 {dimension_numbers = #tpu.dot_dimension_numbers<[1], [0], [0], [1], [0, 0, 1, 1], [], []>} : vector<128x128xf32>, vector<128x1xf32>, vector<128x1xf32> -> vector<128x1xf32>
      %46 = arith.subf %27, %43 : vector<128x1xf32>
      %47 = math.exp %46 : vector<128x1xf32>
      %cst_25 = arith.constant 1.000000e-16 : f32
      %48 = vector.broadcast %cst_25 : f32 to vector<128x1xf32>
      %49 = arith.addf %45, %48 : vector<128x1xf32>
      %50 = arith.divf %47, %49 : vector<128x1xf32>
      %c0_26 = arith.constant 0 : index
      %c0_27 = arith.constant 0 : index
      %51 = vector.load %arg5[%c0_26, %c0_27] : memref<128x128xf32, #tpu.memory_space<vmem>>, vector<128x128xf32>
      %cst_28 = arith.constant dense<0.000000e+00> : vector<128x128xf32>
      %52 = tpu.matmul %10, %51, %cst_28 {dimension_numbers = #tpu.dot_dimension_numbers<[1], [0], [0], [1], [0, 0, 1, 1], [], []>} : vector<128x128xf32>, vector<128x128xf32>, vector<128x128xf32> -> vector<128x128xf32>
      %c0_29 = arith.constant 0 : index
      %c0_30 = arith.constant 0 : index
      %53 = vector.load %arg9[%c0_29, %c0_30] : memref<128x128xf32, #tpu.memory_space<vmem>>, vector<128x128xf32>
      %54 = vector.broadcast %50 : vector<128x1xf32> to vector<128x128xf32>
      %55 = arith.mulf %54, %52 : vector<128x128xf32>
      %cst_31 = arith.constant dense<0.000000e+00> : vector<128x128xf32>
      %56 = tpu.matmul %15, %55, %cst_31 {dimension_numbers = #tpu.dot_dimension_numbers<[0], [0], [1], [1], [0, 1, 1, 1], [], []>} : vector<128x128xf32>, vector<128x128xf32>, vector<128x128xf32> -> vector<128x128xf32>
      %57 = arith.addf %53, %56 : vector<128x128xf32>
      %c0_32 = arith.constant 0 : index
      %c0_33 = arith.constant 0 : index
      %58 = vector.load %arg9[%c0_32, %c0_33] : memref<128x128xf32, #tpu.memory_space<vmem>>, vector<128x128xf32>
      tpu.vector_store %arg9[%c0_32, %c0_33], %57 {strides = array<i32>} : memref<128x128xf32, #tpu.memory_space<vmem>>, vector<128x128xf32>,
    } else {
    }
    %c2_i32_16 = arith.constant 2 : i32
    %37 = arith.cmpi eq, %arg0, %c2_i32_16 : i32
    %c0_i32_17 = arith.constant 0 : i32
    %38 = arith.cmpi eq, %arg1, %c0_i32_17 : i32
    %39 = arith.andi %37, %38 : i1
    %40 = arith.extui %39 : i1 to i32
    %c0_i32_18 = arith.constant 0 : i32
    %41 = arith.cmpi ne, %40, %c0_i32_18 : i32
    scf.if %41 {
      %c0_19 = arith.constant 0 : index
      %c0_20 = arith.constant 0 : index
      %42 = vector.load %arg9[%c0_19, %c0_20] : memref<128x128xf32, #tpu.memory_space<vmem>>, vector<128x128xf32>
      %cst_21 = arith.constant 0.000000e+00 : f32
      %43 = vector.broadcast %cst_21 : f32 to vector<128x128xf32>
      %44 = arith.maximumf %42, %43 : vector<128x128xf32>
      %c0_22 = arith.constant 0 : index
      %c0_23 = arith.constant 0 : index
      %45 = vector.load %arg6[%c0_22, %c0_23] : memref<128x128xf32, #tpu.memory_space<vmem>>, vector<128x128xf32>
      tpu.vector_store %arg6[%c0_22, %c0_23], %44 {strides = array<i32>} : memref<128x128xf32, #tpu.memory_space<vmem>>, vector<128x128xf32>,
    } else {
    }
    return
  }
  func.func @transform_0(%arg0: i32, %arg1: i32) -> (i32, i32) {
    %c0_i32 = arith.constant 0 : i32
    %c0_i32_0 = arith.constant 0 : i32
    return %arg1, %c0_i32 : i32, i32
  }
  func.func @transform_1(%arg0: i32, %arg1: i32) -> (i32, i32) {
    %c0_i32 = arith.constant 0 : i32
    %c0_i32_0 = arith.constant 0 : i32
    return %arg1, %c0_i32 : i32, i32
  }
  func.func @transform_2(%arg0: i32, %arg1: i32) -> (i32, i32) {
    %c0_i32 = arith.constant 0 : i32
    %c0_i32_0 = arith.constant 0 : i32
    %c0_i32_1 = arith.constant 0 : i32
    return %c0_i32, %c0_i32_0 : i32, i32
  }
  func.func @transform_3(%arg0: i32, %arg1: i32) -> (i32, i32) {
    %c0_i32 = arith.constant 0 : i32
    %c0_i32_0 = arith.constant 0 : i32
    %c0_i32_1 = arith.constant 0 : i32
    return %c0_i32, %c0_i32_0 : i32, i32
  }
  func.func @transform_4(%arg0: i32, %arg1: i32) -> (i32, i32) {
    %c0_i32 = arith.constant 0 : i32
    %c0_i32_0 = arith.constant 0 : i32
    %c0_i32_1 = arith.constant 0 : i32
    return %c0_i32, %c0_i32_0 : i32, i32
  }
}

</mosaic_0001>

<llo_original>
// kernel: tpu_custom_call.1
$region0: #{tpu_custom_call.1}
  #allocation0 [shape = 'u32[]', space=smem, size = 0x4, offset = 0x4, fixed_abs, tag = 'smem constant byte address 0x4 - core index']
  #allocation1 [shape = 'u32[72,128]{1,0:T(1,128)}', space=vmem, size = 0x9000, scoped, tag = 'internal scratch']
  #allocation2 [shape = 'f32[1,128]{1,0:T(1,128)}', space=vmem, size = 0x200, scoped, tag = 'scratch operand']
  #allocation3 [shape = 'f32[128,1]{1,0:T(8,128)}', space=vmem, size = 0x10000, scoped, tag = 'scratch operand']
  #allocation4 [shape = 'f32[128,128]{1,0:T(8,128)}', space=vmem, size = 0x10000, scoped, tag = 'scratch operand']
  %s0 = inlined_call_operand.vmem [shape: s32[128,1], index: 0, kind: input, shape index: {}]
  %s1 = inlined_call_operand.vmem [shape: s32[128,1], index: 1, kind: input, shape index: {}]
  %s2 = inlined_call_operand.vmem [shape: f32[128,128], index: 2, kind: input, shape index: {}]
  %s3 = inlined_call_operand.vmem [shape: f32[128,128], index: 3, kind: input, shape index: {}]
  %s4 = inlined_call_operand.hbm [shape: f32[128,128], index: 4, kind: output, shape index: {}]
  %s5 = sld [smem:[#allocation0]]
  $region69: #{tpu_custom_call.1} parent=0
    _
  %s7 = ssub.s32 1, %s5
  %s8 = scalar_select 0, %s7, %s5
  $region1: #{tpu_custom_call.1} parent=0
    #allocation5 [shape = 'u8[65536]{0}', space=vmem, size = 0x10000, scoped, tag = 'output window, operand 0, single buffered']
    #allocation6 [shape = 's32[2]{0}', space=sflag, size = 0x8, scoped, tag = 'scoped memory for tpu_custom_call.1']
    %9 = vsyncpa [#allocation6], 0
    loop: start=0, step=1, limit=5
    $region2: #{tpu_custom_call.1} parent=1 // loop_pre_header
      _
    $region3: #{tpu_custom_call.1} parent=1 // loop_header
      %s11 = sphi 0, %s15
      %p12 = scmp.ge.s32.totalorder %s11, 5
      %s18 = sphi 0, %s30
      %s19 = sphi 0, %s26
      %s20 = sphi 0, %s18
      %s21 = sphi 0, %s19
      %s22 = sphi 0, %s20
      %s23 = sphi 0, %s21
      %s33 = sphi 0, %s35
      %s36 = sphi 0, %s33
      %s37 = sphi 0, %s36
      %s53 = sphi 0, %s37
      %s59 = sphi 0, %s61
      %s62 = sphi 0, %s59
      %s63 = sphi 0, %s62
      %s79 = sphi 0, %s63
      %s83 = sphi 0, %s83
      %s85 = sphi 0, %s83
      %s86 = sphi 0, %s85
      %s100 = sphi 0, %s86
      %s104 = sphi 0, %s104
      %s106 = sphi 0, %s104
      %s107 = sphi 0, %s106
      %s121 = sphi 0, %s107
      %s125 = sphi 0, %s125
      %s127 = sphi 0, %s125
      %s128 = sphi 0, %s127
      %s142 = sphi 0, %s128
    $region4: #{tpu_custom_call.1} parent=1 // loop_header_branch
      %14 = sbr.rel (%p12) target = $region8
    $region5: #{tpu_custom_call.1} parent=1 // loop_body
      %s16 = ssub.s32 %s11, 1
      %s17 = ssub.s32 %s11, 2
      %s24 = sadd.s32 1, %s19
      %p25 = scmp.ge.s32.totalorder %s24, 1
      %s26 = scalar_select %p25, 0, %s24
      %s27 = sadd.s32 1, %s18
      %s28 = scalar_select %p25, %s27, %s18
      %p29 = scmp.ge.s32.totalorder %s28, 3
      %s30 = scalar_select %p29, 0, %s28
      %s31 = ssub.s32 %s19, %s26
      %p32 = scmp.eq.s32.totalorder %s31, 0
      %s34 = sadd.s32 %s33, 1
      %s35 = scalar_select %p32, %s33, %s34
      %p38 = pneg %p32
      %p39 = scmp.eq.s32.totalorder %s11, 2
      %p40 = por %p38, %p39
      %p41 = scmp.ne.s32.totalorder %s33, %s36
      %p42 = scmp.eq.s32.totalorder %s11, 0
      %p43 = por %p41, %p42
      %p44 = scmp.ne.s32.totalorder %s33, %s36
      %p45 = scmp.eq.s32.totalorder %s16, 2
      %p46 = por %p44, %p45
      %p47 = scmp.ne.s32.totalorder %s36, %s37
      %p48 = scmp.eq.s32.totalorder %s16, 0
      %p49 = por %p47, %p48
      %p50 = scmp.ne.s32.totalorder %s36, %s37
      %p51 = scmp.eq.s32.totalorder %s17, 2
      %p52 = por %p50, %p51
      %p54 = scmp.ne.s32.totalorder %s37, %s53
      %p55 = scmp.eq.s32.totalorder %s17, 0
      %p56 = por %p54, %p55
      %s57 = ssub.s32 %s19, %s26
      %p58 = scmp.eq.s32.totalorder %s57, 0
      %s60 = sadd.s32 %s59, 1
      %s61 = scalar_select %p58, %s59, %s60
      %p64 = pneg %p58
      %p65 = scmp.eq.s32.totalorder %s11, 2
      %p66 = por %p64, %p65
      %p67 = scmp.ne.s32.totalorder %s59, %s62
      %p68 = scmp.eq.s32.totalorder %s11, 0
      %p69 = por %p67, %p68
      %p70 = scmp.ne.s32.totalorder %s59, %s62
      %p71 = scmp.eq.s32.totalorder %s16, 2
      %p72 = por %p70, %p71
      %p73 = scmp.ne.s32.totalorder %s62, %s63
      %p74 = scmp.eq.s32.totalorder %s16, 0
      %p75 = por %p73, %p74
      %p76 = scmp.ne.s32.totalorder %s62, %s63
      %p77 = scmp.eq.s32.totalorder %s17, 2
      %p78 = por %p76, %p77
      %p80 = scmp.ne.s32.totalorder %s63, %s79
      %p81 = scmp.eq.s32.totalorder %s17, 0
      %p82 = por %p80, %p81
      %s84 = sadd.s32 %s83, 1
      %p87 = scmp.eq.s32.totalorder %s11, 2
      %p88 = scmp.ne.s32.totalorder %s83, %s85
      %p89 = scmp.eq.s32.totalorder %s11, 0
      %p90 = por %p88, %p89
      %p91 = scmp.ne.s32.totalorder %s83, %s85
      %p92 = scmp.eq.s32.totalorder %s16, 2
      %p93 = por %p91, %p92
      %p94 = scmp.ne.s32.totalorder %s85, %s86
      %p95 = scmp.eq.s32.totalorder %s16, 0
      %p96 = por %p94, %p95
      %p97 = scmp.ne.s32.totalorder %s85, %s86
      %p98 = scmp.eq.s32.totalorder %s17, 2
      %p99 = por %p97, %p98
      %p101 = scmp.ne.s32.totalorder %s86, %s100
      %p102 = scmp.eq.s32.totalorder %s17, 0
      %p103 = por %p101, %p102
      %s105 = sadd.s32 %s104, 1
      %p108 = scmp.eq.s32.totalorder %s11, 2
      %p109 = scmp.ne.s32.totalorder %s104, %s106
      %p110 = scmp.eq.s32.totalorder %s11, 0
      %p111 = por %p109, %p110
      %p112 = scmp.ne.s32.totalorder %s104, %s106
      %p113 = scmp.eq.s32.totalorder %s16, 2
      %p114 = por %p112, %p113
      %p115 = scmp.ne.s32.totalorder %s106, %s107
      %p116 = scmp.eq.s32.totalorder %s16, 0
      %p117 = por %p115, %p116
      %p118 = scmp.ne.s32.totalorder %s106, %s107
      %p119 = scmp.eq.s32.totalorder %s17, 2
      %p120 = por %p118, %p119
      %p122 = scmp.ne.s32.totalorder %s107, %s121
      %p123 = scmp.eq.s32.totalorder %s17, 0
      %p124 = por %p122, %p123
      %s126 = sadd.s32 %s125, 1
      %p129 = scmp.eq.s32.totalorder %s11, 2
      %p130 = scmp.ne.s32.totalorder %s125, %s127
      %p131 = scmp.eq.s32.totalorder %s11, 0
      %p132 = por %p130, %p131
      %p133 = scmp.ne.s32.totalorder %s125, %s127
      %p134 = scmp.eq.s32.totalorder %s16, 2
      %p135 = por %p133, %p134
      %p136 = scmp.ne.s32.totalorder %s127, %s128
      %p137 = scmp.eq.s32.totalorder %s16, 0
      %p138 = por %p136, %p137
      %p139 = scmp.ne.s32.totalorder %s127, %s128
      %p140 = scmp.eq.s32.totalorder %s17, 2
      %p141 = por %p139, %p140
      %p143 = scmp.ne.s32.totalorder %s128, %s142
      %p144 = scmp.eq.s32.totalorder %s17, 0
      %p145 = por %p143, %p144
      %p146 = scmp.le.s32.totalorder 1, %s11
      %p147 = scmp.lt.s32.totalorder %s11, 4
      %p148 = pnand %p146, %p147
      %p149 = pneg %p148
      // Predicated region
      $region9: #{tpu_custom_call.1} parent=5 // pred_check
        _
      $region10: #{tpu_custom_call.1} parent=5 // pred_check_branch
        %151 = sbr.rel (%p148) target = $region12
      $region11: #{tpu_custom_call.1} parent=5 // pred_region
        %s152 = ssub.s32 %s11, 1
        // Predicated region
        $region13: #{tpu_custom_call.1} parent=11 // pred_check
          %p153 = pneg %p49
        $region14: #{tpu_custom_call.1} parent=11 // pred_check_branch
          %155 = sbr.rel (%p153) target = $region16
        $region15: #{tpu_custom_call.1} parent=11 // pred_region
          %s156 = smul.u32 16, %s21
          %p157 = scmp.lt.s32.totalorder %s156, 15
          %s158 = scalar_select %p157, %s156, 15
          %s159 = smul.addr %s158, 8
          %s160 = scalar_lea.vmem %s0, %s159
          %s161 = smul.u32 16, %s21
        $region16: #{tpu_custom_call.1} parent=11 // pred_fallthru
          _
        // Predicated region
        $region17: #{tpu_custom_call.1} parent=11 // pred_check
          %p162 = pneg %p75
        $region18: #{tpu_custom_call.1} parent=11 // pred_check_branch
          %164 = sbr.rel (%p162) target = $region20
        $region19: #{tpu_custom_call.1} parent=11 // pred_region
          %s165 = smul.u32 16, %s21
          %p166 = scmp.lt.s32.totalorder %s165, 15
          %s167 = scalar_select %p166, %s165, 15
          %s168 = smul.addr %s167, 8
          %s169 = scalar_lea.vmem %s1, %s168
          %s170 = smul.u32 16, %s21
        $region20: #{tpu_custom_call.1} parent=11 // pred_fallthru
          _
        // Predicated region
        $region21: #{tpu_custom_call.1} parent=11 // pred_check
          %p171 = pneg %p96
        $region22: #{tpu_custom_call.1} parent=11 // pred_check_branch
          %173 = sbr.rel (%p171) target = $region24
        $region23: #{tpu_custom_call.1} parent=11 // pred_region
          _
        $region24: #{tpu_custom_call.1} parent=11 // pred_fallthru
          _
        // Predicated region
        $region25: #{tpu_custom_call.1} parent=11 // pred_check
          %p174 = pneg %p117
        $region26: #{tpu_custom_call.1} parent=11 // pred_check_branch
          %176 = sbr.rel (%p174) target = $region28
        $region27: #{tpu_custom_call.1} parent=11 // pred_region
          _
        $region28: #{tpu_custom_call.1} parent=11 // pred_fallthru
          _
      $region12: #{tpu_custom_call.1} parent=5 // pred_fallthru
        _
      %p177 = scmp.lt.s32.totalorder %s11, 3
      // Predicated region
      $region29: #{tpu_custom_call.1} parent=5 // pred_check
        %p178 = pneg %p177
      $region30: #{tpu_custom_call.1} parent=5 // pred_check_branch
        %180 = sbr.rel (%p178) target = $region32
      $region31: #{tpu_custom_call.1} parent=5 // pred_region
        _
      $region32: #{tpu_custom_call.1} parent=5 // pred_fallthru
        _
      %p181 = scmp.le.s32.totalorder 1, %s11
      %p182 = scmp.lt.s32.totalorder %s11, 4
      %p183 = pnand %p181, %p182
      %p184 = pneg %p183
      // Predicated region
      $region33: #{tpu_custom_call.1} parent=5 // pred_check
        _
      $region34: #{tpu_custom_call.1} parent=5 // pred_check_branch
        %186 = sbr.rel (%p183) target = $region36
      $region35: #{tpu_custom_call.1} parent=5 // pred_region
        %s187 = ssub.s32 %s11, 1
        %s188 = smul.u32 16, %s21
        %p189 = scmp.lt.s32.totalorder %s188, 15
        %s190 = scalar_select %p189, %s188, 15
        %s191 = smul.addr %s190, 8
        %s192 = scalar_lea.vmem %s0, %s191
        %p193 = pneg %p49
        %p194 = pneg %p46
        %s195 = smul.u32 16, %s21
        %p196 = scmp.lt.s32.totalorder %s195, 15
        %s197 = scalar_select %p196, %s195, 15
        %s198 = smul.addr %s197, 8
        %s199 = scalar_lea.vmem %s1, %s198
        %p200 = pneg %p75
        %p201 = pneg %p72
        %p202 = pneg %p96
        %p203 = pneg %p93
        %p204 = pneg %p117
        %p205 = pneg %p114
        %p206 = pneg %p138
        %p207 = pneg %p135
        %s208 = smul.u32 16, %s21
        %p209 = scmp.lt.s32.totalorder %s208, 15
        %s210 = scalar_select %p209, %s208, 15
        %s211 = smul.addr %s210, 8
        %s212 = scalar_lea.vmem %s0, %s211
        %s213 = smul.u32 16, %s21
        %s214 = smul.u32 16, %s21
        %p215 = scmp.lt.s32.totalorder %s214, 15
        %s216 = scalar_select %p215, %s214, 15
        %s217 = smul.addr %s216, 8
        %s218 = scalar_lea.vmem %s1, %s217
        %s219 = smul.u32 16, %s21
        %p220 = scmp.eq.s32.totalorder %s20, 0
        %p221 = scmp.eq.s32.totalorder %s21, 0
        %p222 = pnand %p220, %p221
        %p223 = pneg %p222
        // Predicated region
        $region37: #{tpu_custom_call.1} parent=35 // pred_check
          _
        $region38: #{tpu_custom_call.1} parent=35 // pred_check_branch
          %225 = sbr.rel (%p222) target = $region40
        $region39: #{tpu_custom_call.1} parent=35 // pred_region
          %226 = vst [vmem:[#allocation2] sm:$0x1] -1e+30
          %vm227 = vcmask 7168
          %228 = vst.msk [vmem:[#allocation3] sm:$0xff] %vm227, 0.0
          %229 = vst.msk [vmem:[#allocation3 + $0x8] sm:$0xff] %vm227, 0.0
          %230 = vst.msk [vmem:[#allocation3 + $0x10] sm:$0xff] %vm227, 0.0
          %231 = vst.msk [vmem:[#allocation3 + $0x18] sm:$0xff] %vm227, 0.0
          %232 = vst.msk [vmem:[#allocation3 + $0x20] sm:$0xff] %vm227, 0.0
          %233 = vst.msk [vmem:[#allocation3 + $0x28] sm:$0xff] %vm227, 0.0
          %234 = vst.msk [vmem:[#allocation3 + $0x30] sm:$0xff] %vm227, 0.0
          %235 = vst.msk [vmem:[#allocation3 + $0x38] sm:$0xff] %vm227, 0.0
          %236 = vst.msk [vmem:[#allocation3 + $0x40] sm:$0xff] %vm227, 0.0
          %237 = vst.msk [vmem:[#allocation3 + $0x48] sm:$0xff] %vm227, 0.0
          %238 = vst.msk [vmem:[#allocation3 + $0x50] sm:$0xff] %vm227, 0.0
          %239 = vst.msk [vmem:[#allocation3 + $0x58] sm:$0xff] %vm227, 0.0
          %240 = vst.msk [vmem:[#allocation3 + $0x60] sm:$0xff] %vm227, 0.0
          %241 = vst.msk [vmem:[#allocation3 + $0x68] sm:$0xff] %vm227, 0.0
          %242 = vst.msk [vmem:[#allocation3 + $0x70] sm:$0xff] %vm227, 0.0
          %243 = vst.msk [vmem:[#allocation3 + $0x78] sm:$0xff] %vm227, 0.0
          %244 = vst [vmem:[#allocation4] sm:$0xff] 0.0
          %245 = vst [vmem:[#allocation4 + $0x8] sm:$0xff] 0.0
          %246 = vst [vmem:[#allocation4 + $0x10] sm:$0xff] 0.0
          %247 = vst [vmem:[#allocation4 + $0x18] sm:$0xff] 0.0
          %248 = vst [vmem:[#allocation4 + $0x20] sm:$0xff] 0.0
          %249 = vst [vmem:[#allocation4 + $0x28] sm:$0xff] 0.0
          %250 = vst [vmem:[#allocation4 + $0x30] sm:$0xff] 0.0
          %251 = vst [vmem:[#allocation4 + $0x38] sm:$0xff] 0.0
          %252 = vst [vmem:[#allocation4 + $0x40] sm:$0xff] 0.0
          %253 = vst [vmem:[#allocation4 + $0x48] sm:$0xff] 0.0
          %254 = vst [vmem:[#allocation4 + $0x50] sm:$0xff] 0.0
          %255 = vst [vmem:[#allocation4 + $0x58] sm:$0xff] 0.0
          %256 = vst [vmem:[#allocation4 + $0x60] sm:$0xff] 0.0
          %257 = vst [vmem:[#allocation4 + $0x68] sm:$0xff] 0.0
          %258 = vst [vmem:[#allocation4 + $0x70] sm:$0xff] 0.0
          %259 = vst [vmem:[#allocation4 + $0x78] sm:$0xff] 0.0
        $region40: #{tpu_custom_call.1} parent=35 // pred_fallthru
          _
        %v260 = vlaneseq
        %v261 = vand.u32 %v260, 127
        %v262 = vld [vmem:[%s218] sm:$0xff]
        %v263 = vld [vmem:[%s218 + $0x8] sm:$0xff]
        %v264 = vld [vmem:[%s218 + $0x10] sm:$0xff]
        %v265 = vld [vmem:[%s218 + $0x18] sm:$0xff]
        %v266 = vld [vmem:[%s218 + $0x20] sm:$0xff]
        %v267 = vld [vmem:[%s218 + $0x28] sm:$0xff]
        %v268 = vld [vmem:[%s218 + $0x30] sm:$0xff]
        %v269 = vld [vmem:[%s218 + $0x38] sm:$0xff]
        %v270 = vld [vmem:[%s218 + $0x40] sm:$0xff]
        %v271 = vld [vmem:[%s218 + $0x48] sm:$0xff]
        %v272 = vld [vmem:[%s218 + $0x50] sm:$0xff]
        %v273 = vld [vmem:[%s218 + $0x58] sm:$0xff]
        %v274 = vld [vmem:[%s218 + $0x60] sm:$0xff]
        %v275 = vld [vmem:[%s218 + $0x68] sm:$0xff]
        %v276 = vld [vmem:[%s218 + $0x70] sm:$0xff]
        %v277 = vld [vmem:[%s218 + $0x78] sm:$0xff]
        %278 = vset.pattern.permute.xlu0 0
        %279 = vperm.xlu0 %278, %v262
        %v280 = vpop.permute.xlu0 %279
        %281 = vset.pattern.permute.xlu0 0
        %282 = vperm.xlu0 %281, %v263
        %v283 = vpop.permute.xlu0 %282
        %284 = vset.pattern.permute.xlu0 0
        %285 = vperm.xlu0 %284, %v264
        %v286 = vpop.permute.xlu0 %285
        %287 = vset.pattern.permute.xlu0 0
        %288 = vperm.xlu0 %287, %v265
        %v289 = vpop.permute.xlu0 %288
        %290 = vset.pattern.permute.xlu0 0
        %291 = vperm.xlu0 %290, %v266
        %v292 = vpop.permute.xlu0 %291
        %293 = vset.pattern.permute.xlu0 0
        %294 = vperm.xlu0 %293, %v267
        %v295 = vpop.permute.xlu0 %294
        %296 = vset.pattern.permute.xlu0 0
        %297 = vperm.xlu0 %296, %v268
        %v298 = vpop.permute.xlu0 %297
        %299 = vset.pattern.permute.xlu0 0
        %300 = vperm.xlu0 %299, %v269
        %v301 = vpop.permute.xlu0 %300
        %302 = vset.pattern.permute.xlu0 0
        %303 = vperm.xlu0 %302, %v270
        %v304 = vpop.permute.xlu0 %303
        %305 = vset.pattern.permute.xlu0 0
        %306 = vperm.xlu0 %305, %v271
        %v307 = vpop.permute.xlu0 %306
        %308 = vset.pattern.permute.xlu0 0
        %309 = vperm.xlu0 %308, %v272
        %v310 = vpop.permute.xlu0 %309
        %311 = vset.pattern.permute.xlu0 0
        %312 = vperm.xlu0 %311, %v273
        %v313 = vpop.permute.xlu0 %312
        %314 = vset.pattern.permute.xlu0 0
        %315 = vperm.xlu0 %314, %v274
        %v316 = vpop.permute.xlu0 %315
        %317 = vset.pattern.permute.xlu0 0
        %318 = vperm.xlu0 %317, %v275
        %v319 = vpop.permute.xlu0 %318
        %320 = vset.pattern.permute.xlu0 0
        %321 = vperm.xlu0 %320, %v276
        %v322 = vpop.permute.xlu0 %321
        %323 = vset.pattern.permute.xlu0 0
        %324 = vperm.xlu0 %323, %v277
        %v325 = vpop.permute.xlu0 %324
        %vm326 = vcmp.eq.s32.totalorder %v280, %v261
        %vm327 = vcmp.eq.s32.totalorder %v283, %v261
        %vm328 = vcmp.eq.s32.totalorder %v286, %v261
        %vm329 = vcmp.eq.s32.totalorder %v289, %v261
        %vm330 = vcmp.eq.s32.totalorder %v292, %v261
        %vm331 = vcmp.eq.s32.totalorder %v295, %v261
        %vm332 = vcmp.eq.s32.totalorder %v298, %v261
        %vm333 = vcmp.eq.s32.totalorder %v301, %v261
        %vm334 = vcmp.eq.s32.totalorder %v304, %v261
        %vm335 = vcmp.eq.s32.totalorder %v307, %v261
        %vm336 = vcmp.eq.s32.totalorder %v310, %v261
        %vm337 = vcmp.eq.s32.totalorder %v313, %v261
        %vm338 = vcmp.eq.s32.totalorder %v316, %v261
        %vm339 = vcmp.eq.s32.totalorder %v319, %v261
        %vm340 = vcmp.eq.s32.totalorder %v322, %v261
        %vm341 = vcmp.eq.s32.totalorder %v325, %v261
        %v342 = vsel %vm326, 1, 0
        %v343 = vsel %vm327, 1, 0
        %v344 = vsel %vm328, 1, 0
        %v345 = vsel %vm329, 1, 0
        %v346 = vsel %vm330, 1, 0
        %v347 = vsel %vm331, 1, 0
        %v348 = vsel %vm332, 1, 0
        %v349 = vsel %vm333, 1, 0
        %v350 = vsel %vm334, 1, 0
        %v351 = vsel %vm335, 1, 0
        %v352 = vsel %vm336, 1, 0
        %v353 = vsel %vm337, 1, 0
        %v354 = vsel %vm338, 1, 0
        %v355 = vsel %vm339, 1, 0
        %v356 = vsel %vm340, 1, 0
        %v357 = vsel %vm341, 1, 0
        %v358 = vcvt.s32.f32 %v342
        %v359 = vcvt.s32.f32 %v343
        %v360 = vcvt.s32.f32 %v344
        %v361 = vcvt.s32.f32 %v345
        %v362 = vcvt.s32.f32 %v346
        %v363 = vcvt.s32.f32 %v347
        %v364 = vcvt.s32.f32 %v348
        %v365 = vcvt.s32.f32 %v349
        %v366 = vcvt.s32.f32 %v350
        %v367 = vcvt.s32.f32 %v351
        %v368 = vcvt.s32.f32 %v352
        %v369 = vcvt.s32.f32 %v353
        %v370 = vcvt.s32.f32 %v354
        %v371 = vcvt.s32.f32 %v355
        %v372 = vcvt.s32.f32 %v356
        %v373 = vcvt.s32.f32 %v357
        %v374 = vld [vmem:[%s212] sm:$0xff]
        %v375 = vld [vmem:[%s212 + $0x8] sm:$0xff]
        %v376 = vld [vmem:[%s212 + $0x10] sm:$0xff]
        %v377 = vld [vmem:[%s212 + $0x18] sm:$0xff]
        %v378 = vld [vmem:[%s212 + $0x20] sm:$0xff]
        %v379 = vld [vmem:[%s212 + $0x28] sm:$0xff]
        %v380 = vld [vmem:[%s212 + $0x30] sm:$0xff]
        %v381 = vld [vmem:[%s212 + $0x38] sm:$0xff]
        %v382 = vld [vmem:[%s212 + $0x40] sm:$0xff]
        %v383 = vld [vmem:[%s212 + $0x48] sm:$0xff]
        %v384 = vld [vmem:[%s212 + $0x50] sm:$0xff]
        %v385 = vld [vmem:[%s212 + $0x58] sm:$0xff]
        %v386 = vld [vmem:[%s212 + $0x60] sm:$0xff]
        %v387 = vld [vmem:[%s212 + $0x68] sm:$0xff]
        %v388 = vld [vmem:[%s212 + $0x70] sm:$0xff]
        %v389 = vld [vmem:[%s212 + $0x78] sm:$0xff]
        %390 = vset.pattern.permute.xlu0 0
        %391 = vperm.xlu0 %390, %v374
        %v392 = vpop.permute.xlu0 %391
        %393 = vset.pattern.permute.xlu0 0
        %394 = vperm.xlu0 %393, %v375
        %v395 = vpop.permute.xlu0 %394
        %396 = vset.pattern.permute.xlu0 0
        %397 = vperm.xlu0 %396, %v376
        %v398 = vpop.permute.xlu0 %397
        %399 = vset.pattern.permute.xlu0 0
        %400 = vperm.xlu0 %399, %v377
        %v401 = vpop.permute.xlu0 %400
        %402 = vset.pattern.permute.xlu0 0
        %403 = vperm.xlu0 %402, %v378
        %v404 = vpop.permute.xlu0 %403
        %405 = vset.pattern.permute.xlu0 0
        %406 = vperm.xlu0 %405, %v379
        %v407 = vpop.permute.xlu0 %406
        %408 = vset.pattern.permute.xlu0 0
        %409 = vperm.xlu0 %408, %v380
        %v410 = vpop.permute.xlu0 %409
        %411 = vset.pattern.permute.xlu0 0
        %412 = vperm.xlu0 %411, %v381
        %v413 = vpop.permute.xlu0 %412
        %414 = vset.pattern.permute.xlu0 0
        %415 = vperm.xlu0 %414, %v382
        %v416 = vpop.permute.xlu0 %415
        %417 = vset.pattern.permute.xlu0 0
        %418 = vperm.xlu0 %417, %v383
        %v419 = vpop.permute.xlu0 %418
        %420 = vset.pattern.permute.xlu0 0
        %421 = vperm.xlu0 %420, %v384
        %v422 = vpop.permute.xlu0 %421
        %423 = vset.pattern.permute.xlu0 0
        %424 = vperm.xlu0 %423, %v385
        %v425 = vpop.permute.xlu0 %424
        %426 = vset.pattern.permute.xlu0 0
        %427 = vperm.xlu0 %426, %v386
        %v428 = vpop.permute.xlu0 %427
        %429 = vset.pattern.permute.xlu0 0
        %430 = vperm.xlu0 %429, %v387
        %v431 = vpop.permute.xlu0 %430
        %432 = vset.pattern.permute.xlu0 0
        %433 = vperm.xlu0 %432, %v388
        %v434 = vpop.permute.xlu0 %433
        %435 = vset.pattern.permute.xlu0 0
        %436 = vperm.xlu0 %435, %v389
        %v437 = vpop.permute.xlu0 %436
        %vm438 = vcmp.eq.s32.totalorder %v392, %v261
        %vm439 = vcmp.eq.s32.totalorder %v395, %v261
        %vm440 = vcmp.eq.s32.totalorder %v398, %v261
        %vm441 = vcmp.eq.s32.totalorder %v401, %v261
        %vm442 = vcmp.eq.s32.totalorder %v404, %v261
        %vm443 = vcmp.eq.s32.totalorder %v407, %v261
        %vm444 = vcmp.eq.s32.totalorder %v410, %v261
        %vm445 = vcmp.eq.s32.totalorder %v413, %v261
        %vm446 = vcmp.eq.s32.totalorder %v416, %v261
        %vm447 = vcmp.eq.s32.totalorder %v419, %v261
        %vm448 = vcmp.eq.s32.totalorder %v422, %v261
        %vm449 = vcmp.eq.s32.totalorder %v425, %v261
        %vm450 = vcmp.eq.s32.totalorder %v428, %v261
        %vm451 = vcmp.eq.s32.totalorder %v431, %v261
        %vm452 = vcmp.eq.s32.totalorder %v434, %v261
        %vm453 = vcmp.eq.s32.totalorder %v437, %v261
        %v454 = vsel %vm438, 1, 0
        %v455 = vsel %vm439, 1, 0
        %v456 = vsel %vm440, 1, 0
        %v457 = vsel %vm441, 1, 0
        %v458 = vsel %vm442, 1, 0
        %v459 = vsel %vm443, 1, 0
        %v460 = vsel %vm444, 1, 0
        %v461 = vsel %vm445, 1, 0
        %v462 = vsel %vm446, 1, 0
        %v463 = vsel %vm447, 1, 0
        %v464 = vsel %vm448, 1, 0
        %v465 = vsel %vm449, 1, 0
        %v466 = vsel %vm450, 1, 0
        %v467 = vsel %vm451, 1, 0
        %v468 = vsel %vm452, 1, 0
        %v469 = vsel %vm453, 1, 0
        %v470 = vcvt.s32.f32 %v454
        %v471 = vcvt.s32.f32 %v455
        %v472 = vcvt.s32.f32 %v456
        %v473 = vcvt.s32.f32 %v457
        %v474 = vcvt.s32.f32 %v458
        %v475 = vcvt.s32.f32 %v459
        %v476 = vcvt.s32.f32 %v460
        %v477 = vcvt.s32.f32 %v461
        %v478 = vcvt.s32.f32 %v462
        %v479 = vcvt.s32.f32 %v463
        %v480 = vcvt.s32.f32 %v464
        %v481 = vcvt.s32.f32 %v465
        %v482 = vcvt.s32.f32 %v466
        %v483 = vcvt.s32.f32 %v467
        %v484 = vcvt.s32.f32 %v468
        %v485 = vcvt.s32.f32 %v469
        %v486 = vld [vmem:[%s2] sm:$0xff]
        %v487 = vld [vmem:[%s2 + $0x8] sm:$0xff]
        %v488 = vld [vmem:[%s2 + $0x10] sm:$0xff]
        %v489 = vld [vmem:[%s2 + $0x18] sm:$0xff]
        %v490 = vld [vmem:[%s2 + $0x20] sm:$0xff]
        %v491 = vld [vmem:[%s2 + $0x28] sm:$0xff]
        %v492 = vld [vmem:[%s2 + $0x30] sm:$0xff]
        %v493 = vld [vmem:[%s2 + $0x38] sm:$0xff]
        %v494 = vld [vmem:[%s2 + $0x40] sm:$0xff]
        %v495 = vld [vmem:[%s2 + $0x48] sm:$0xff]
        %v496 = vld [vmem:[%s2 + $0x50] sm:$0xff]
        %v497 = vld [vmem:[%s2 + $0x58] sm:$0xff]
        %v498 = vld [vmem:[%s2 + $0x60] sm:$0xff]
        %v499 = vld [vmem:[%s2 + $0x68] sm:$0xff]
        %v500 = vld [vmem:[%s2 + $0x70] sm:$0xff]
        %v501 = vld [vmem:[%s2 + $0x78] sm:$0xff]
        %502 = vmatpush.msra.mxu0 %v501
        %503 = vmatpush.msra.mxu0 %v500
        %504 = vmatpush.msra.mxu0 %v499
        %505 = vmatpush.msra.mxu0 %v498
        %506 = vmatpush.msra.mxu0 %v497
        %507 = vmatpush.msra.mxu0 %v496
        %508 = vmatpush.msra.mxu0 %v495
        %509 = vmatpush.msra.mxu0 %v494
        %510 = vmatpush.msra.mxu0 %v493
        %511 = vmatpush.msra.mxu0 %v492
        %512 = vmatpush.msra.mxu0 %v491
        %513 = vmatpush.msra.mxu0 %v490
        %514 = vmatpush.msra.mxu0 %v489
        %515 = vmatpush.msra.mxu0 %v488
        %516 = vmatpush.msra.mxu0 %v487
        %517 = vmatpush.msra.mxu0 %v486
        %518 = vmatmul.f32.gmra.mxu0 %v470
        %v519 = vpop.f32.mrf.mxu0
        %v520 = vadd.f32 0.0, %v519
        %521 = vmatmul.f32.gmra.mxu0 %v471
        %v522 = vpop.f32.mrf.mxu0
        %v523 = vadd.f32 0.0, %v522
        %524 = vmatmul.f32.gmra.mxu0 %v472
        %v525 = vpop.f32.mrf.mxu0
        %v526 = vadd.f32 0.0, %v525
        %527 = vmatmul.f32.gmra.mxu0 %v473
        %v528 = vpop.f32.mrf.mxu0
        %v529 = vadd.f32 0.0, %v528
        %530 = vmatmul.f32.gmra.mxu0 %v474
        %v531 = vpop.f32.mrf.mxu0
        %v532 = vadd.f32 0.0, %v531
        %533 = vmatmul.f32.gmra.mxu0 %v475
        %v534 = vpop.f32.mrf.mxu0
        %v535 = vadd.f32 0.0, %v534
        %536 = vmatmul.f32.gmra.mxu0 %v476
        %v537 = vpop.f32.mrf.mxu0
        %v538 = vadd.f32 0.0, %v537
        %539 = vmatmul.f32.gmra.mxu0 %v477
        %v540 = vpop.f32.mrf.mxu0
        %v541 = vadd.f32 0.0, %v540
        %542 = vmatmul.f32.gmra.mxu0 %v478
        %v543 = vpop.f32.mrf.mxu0
        %v544 = vadd.f32 0.0, %v543
        %545 = vmatmul.f32.gmra.mxu0 %v479
        %v546 = vpop.f32.mrf.mxu0
        %v547 = vadd.f32 0.0, %v546
        %548 = vmatmul.f32.gmra.mxu0 %v480
        %v549 = vpop.f32.mrf.mxu0
        %v550 = vadd.f32 0.0, %v549
        %551 = vmatmul.f32.gmra.mxu0 %v481
        %v552 = vpop.f32.mrf.mxu0
        %v553 = vadd.f32 0.0, %v552
        %554 = vmatmul.f32.gmra.mxu0 %v482
        %v555 = vpop.f32.mrf.mxu0
        %v556 = vadd.f32 0.0, %v555
        %557 = vmatmul.f32.gmra.mxu0 %v483
        %v558 = vpop.f32.mrf.mxu0
        %v559 = vadd.f32 0.0, %v558
        %560 = vmatmul.f32.gmra.mxu0 %v484
        %v561 = vpop.f32.mrf.mxu0
        %v562 = vadd.f32 0.0, %v561
        %563 = vmatmul.f32.gmra.mxu0 %v485
        %v564 = vpop.f32.mrf.mxu0
        %v565 = vadd.f32 0.0, %v564
        %566 = vdwg.mxu0
        %567 = vmatpush.msra.mxu0 %v501
        %568 = vmatpush.msra.mxu0 %v500
        %569 = vmatpush.msra.mxu0 %v499
        %570 = vmatpush.msra.mxu0 %v498
        %571 = vmatpush.msra.mxu0 %v497
        %572 = vmatpush.msra.mxu0 %v496
        %573 = vmatpush.msra.mxu0 %v495
        %574 = vmatpush.msra.mxu0 %v494
        %575 = vmatpush.msra.mxu0 %v493
        %576 = vmatpush.msra.mxu0 %v492
        %577 = vmatpush.msra.mxu0 %v491
        %578 = vmatpush.msra.mxu0 %v490
        %579 = vmatpush.msra.mxu0 %v489
        %580 = vmatpush.msra.mxu0 %v488
        %581 = vmatpush.msra.mxu0 %v487
        %582 = vmatpush.msra.mxu0 %v486
        %583 = vmatmul.f32.gmra.mxu0 %v358
        %v584 = vpop.f32.mrf.mxu0
        %v585 = vadd.f32 0.0, %v584
        %586 = vmatmul.f32.gmra.mxu0 %v359
        %v587 = vpop.f32.mrf.mxu0
        %v588 = vadd.f32 0.0, %v587
        %589 = vmatmul.f32.gmra.mxu0 %v360
        %v590 = vpop.f32.mrf.mxu0
        %v591 = vadd.f32 0.0, %v590
        %592 = vmatmul.f32.gmra.mxu0 %v361
        %v593 = vpop.f32.mrf.mxu0
        %v594 = vadd.f32 0.0, %v593
        %595 = vmatmul.f32.gmra.mxu0 %v362
        %v596 = vpop.f32.mrf.mxu0
        %v597 = vadd.f32 0.0, %v596
        %598 = vmatmul.f32.gmra.mxu0 %v363
        %v599 = vpop.f32.mrf.mxu0
        %v600 = vadd.f32 0.0, %v599
        %601 = vmatmul.f32.gmra.mxu0 %v364
        %v602 = vpop.f32.mrf.mxu0
        %v603 = vadd.f32 0.0, %v602
        %604 = vmatmul.f32.gmra.mxu0 %v365
        %v605 = vpop.f32.mrf.mxu0
        %v606 = vadd.f32 0.0, %v605
        %607 = vmatmul.f32.gmra.mxu0 %v366
        %v608 = vpop.f32.mrf.mxu0
        %v609 = vadd.f32 0.0, %v608
        %610 = vmatmul.f32.gmra.mxu0 %v367
        %v611 = vpop.f32.mrf.mxu0
        %v612 = vadd.f32 0.0, %v611
        %613 = vmatmul.f32.gmra.mxu0 %v368
        %v614 = vpop.f32.mrf.mxu0
        %v615 = vadd.f32 0.0, %v614
        %616 = vmatmul.f32.gmra.mxu0 %v369
        %v617 = vpop.f32.mrf.mxu0
        %v618 = vadd.f32 0.0, %v617
        %619 = vmatmul.f32.gmra.mxu0 %v370
        %v620 = vpop.f32.mrf.mxu0
        %v621 = vadd.f32 0.0, %v620
        %622 = vmatmul.f32.gmra.mxu0 %v371
        %v623 = vpop.f32.mrf.mxu0
        %v624 = vadd.f32 0.0, %v623
        %625 = vmatmul.f32.gmra.mxu0 %v372
        %v626 = vpop.f32.mrf.mxu0
        %v627 = vadd.f32 0.0, %v626
        %628 = vmatmul.f32.gmra.mxu0 %v373
        %v629 = vpop.f32.mrf.mxu0
        %v630 = vadd.f32 0.0, %v629
        %631 = vdwg.mxu0
        %648 = vrot.lane.b32.xlu0 %v585, 127
        %v649 = vpop.permute.xlu0 %648
        %650 = vrot.lane.b32.xlu0 %v588, 127
        %v651 = vpop.permute.xlu0 %650
        %652 = vrot.lane.b32.xlu0 %v591, 127
        %v653 = vpop.permute.xlu0 %652
        %654 = vrot.lane.b32.xlu0 %v594, 127
        %v655 = vpop.permute.xlu0 %654
        %656 = vrot.lane.b32.xlu0 %v597, 127
        %v657 = vpop.permute.xlu0 %656
        %658 = vrot.lane.b32.xlu0 %v600, 127
        %v659 = vpop.permute.xlu0 %658
        %660 = vrot.lane.b32.xlu0 %v603, 127
        %v661 = vpop.permute.xlu0 %660
        %662 = vrot.lane.b32.xlu0 %v606, 127
        %v663 = vpop.permute.xlu0 %662
        %664 = vrot.lane.b32.xlu0 %v609, 127
        %v665 = vpop.permute.xlu0 %664
        %666 = vrot.lane.b32.xlu0 %v612, 127
        %v667 = vpop.permute.xlu0 %666
        %668 = vrot.lane.b32.xlu0 %v615, 127
        %v669 = vpop.permute.xlu0 %668
        %670 = vrot.lane.b32.xlu0 %v618, 127
        %v671 = vpop.permute.xlu0 %670
        %672 = vrot.lane.b32.xlu0 %v621, 127
        %v673 = vpop.permute.xlu0 %672
        %674 = vrot.lane.b32.xlu0 %v624, 127
        %v675 = vpop.permute.xlu0 %674
        %676 = vrot.lane.b32.xlu0 %v627, 127
        %v677 = vpop.permute.xlu0 %676
        %678 = vrot.lane.b32.xlu0 %v630, 127
        %v679 = vpop.permute.xlu0 %678
        %v696 = vadd.f32 %v520, %v649
        %v697 = vadd.f32 %v523, %v651
        %v698 = vadd.f32 %v526, %v653
        %v699 = vadd.f32 %v529, %v655
        %v700 = vadd.f32 %v532, %v657
        %v701 = vadd.f32 %v535, %v659
        %v702 = vadd.f32 %v538, %v661
        %v703 = vadd.f32 %v541, %v663
        %v704 = vadd.f32 %v544, %v665
        %v705 = vadd.f32 %v547, %v667
        %v706 = vadd.f32 %v550, %v669
        %v707 = vadd.f32 %v553, %v671
        %v708 = vadd.f32 %v556, %v673
        %v709 = vadd.f32 %v559, %v675
        %v710 = vadd.f32 %v562, %v677
        %v711 = vadd.f32 %v565, %v679
        %vm712 = vcmp.gt.f32.partialorder %v696, 0.0
        %vm713 = vcmp.gt.f32.partialorder %v697, 0.0
        %vm714 = vcmp.gt.f32.partialorder %v698, 0.0
        %vm715 = vcmp.gt.f32.partialorder %v699, 0.0
        %vm716 = vcmp.gt.f32.partialorder %v700, 0.0
        %vm717 = vcmp.gt.f32.partialorder %v701, 0.0
        %vm718 = vcmp.gt.f32.partialorder %v702, 0.0
        %vm719 = vcmp.gt.f32.partialorder %v703, 0.0
        %vm720 = vcmp.gt.f32.partialorder %v704, 0.0
        %vm721 = vcmp.gt.f32.partialorder %v705, 0.0
        %vm722 = vcmp.gt.f32.partialorder %v706, 0.0
        %vm723 = vcmp.gt.f32.partialorder %v707, 0.0
        %vm724 = vcmp.gt.f32.partialorder %v708, 0.0
        %vm725 = vcmp.gt.f32.partialorder %v709, 0.0
        %vm726 = vcmp.gt.f32.partialorder %v710, 0.0
        %vm727 = vcmp.gt.f32.partialorder %v711, 0.0
        %v728 = vmul.f32 %v696, 0.01
        %v729 = vmul.f32 %v697, 0.01
        %v730 = vmul.f32 %v698, 0.01
        %v731 = vmul.f32 %v699, 0.01
        %v732 = vmul.f32 %v700, 0.01
        %v733 = vmul.f32 %v701, 0.01
        %v734 = vmul.f32 %v702, 0.01
        %v735 = vmul.f32 %v703, 0.01
        %v736 = vmul.f32 %v704, 0.01
        %v737 = vmul.f32 %v705, 0.01
        %v738 = vmul.f32 %v706, 0.01
        %v739 = vmul.f32 %v707, 0.01
        %v740 = vmul.f32 %v708, 0.01
        %v741 = vmul.f32 %v709, 0.01
        %v742 = vmul.f32 %v710, 0.01
        %v743 = vmul.f32 %v711, 0.01
        %v744 = vsel %vm712, %v696, %v728
        %v745 = vsel %vm713, %v697, %v729
        %v746 = vsel %vm714, %v698, %v730
        %v747 = vsel %vm715, %v699, %v731
        %v748 = vsel %vm716, %v700, %v732
        %v749 = vsel %vm717, %v701, %v733
        %v750 = vsel %vm718, %v702, %v734
        %v751 = vsel %vm719, %v703, %v735
        %v752 = vsel %vm720, %v704, %v736
        %v753 = vsel %vm721, %v705, %v737
        %v754 = vsel %vm722, %v706, %v738
        %v755 = vsel %vm723, %v707, %v739
        %v756 = vsel %vm724, %v708, %v740
        %v757 = vsel %vm725, %v709, %v741
        %v758 = vsel %vm726, %v710, %v742
        %v759 = vsel %vm727, %v711, %v743
        // Predicated region
        $region41: #{tpu_custom_call.1} parent=35 // pred_check
          %p760 = pneg %p220
        $region42: #{tpu_custom_call.1} parent=35 // pred_check_branch
          %762 = sbr.rel (%p760) target = $region44
        $region43: #{tpu_custom_call.1} parent=35 // pred_region
          %764 = vset.pattern.permute.xlu0 0
          %765 = vperm.xlu0 %764, %v744
          %v766 = vpop.permute.xlu0 %765
          %769 = vset.pattern.permute.xlu0 0
          %770 = vperm.xlu0 %769, %v745
          %v771 = vpop.permute.xlu0 %770
          %774 = vset.pattern.permute.xlu0 0
          %775 = vperm.xlu0 %774, %v746
          %v776 = vpop.permute.xlu0 %775
          %779 = vset.pattern.permute.xlu0 0
          %780 = vperm.xlu0 %779, %v747
          %v781 = vpop.permute.xlu0 %780
          %784 = vset.pattern.permute.xlu0 0
          %785 = vperm.xlu0 %784, %v748
          %v786 = vpop.permute.xlu0 %785
          %789 = vset.pattern.permute.xlu0 0
          %790 = vperm.xlu0 %789, %v749
          %v791 = vpop.permute.xlu0 %790
          %794 = vset.pattern.permute.xlu0 0
          %795 = vperm.xlu0 %794, %v750
          %v796 = vpop.permute.xlu0 %795
          %799 = vset.pattern.permute.xlu0 0
          %800 = vperm.xlu0 %799, %v751
          %v801 = vpop.permute.xlu0 %800
          %804 = vset.pattern.permute.xlu0 0
          %805 = vperm.xlu0 %804, %v752
          %v806 = vpop.permute.xlu0 %805
          %809 = vset.pattern.permute.xlu0 0
          %810 = vperm.xlu0 %809, %v753
          %v811 = vpop.permute.xlu0 %810
          %814 = vset.pattern.permute.xlu0 0
          %815 = vperm.xlu0 %814, %v754
          %v816 = vpop.permute.xlu0 %815
          %819 = vset.pattern.permute.xlu0 0
          %820 = vperm.xlu0 %819, %v755
          %v821 = vpop.permute.xlu0 %820
          %824 = vset.pattern.permute.xlu0 0
          %825 = vperm.xlu0 %824, %v756
          %v826 = vpop.permute.xlu0 %825
          %829 = vset.pattern.permute.xlu0 0
          %830 = vperm.xlu0 %829, %v757
          %v831 = vpop.permute.xlu0 %830
          %834 = vset.pattern.permute.xlu0 0
          %835 = vperm.xlu0 %834, %v758
          %v836 = vpop.permute.xlu0 %835
          %839 = vset.pattern.permute.xlu0 0
          %840 = vperm.xlu0 %839, %v759
          %v841 = vpop.permute.xlu0 %840
          %v843 = vsel %vm326, %v766, -1e+30
          %v844 = vsel %vm327, %v771, -1e+30
          %v845 = vsel %vm328, %v776, -1e+30
          %v846 = vsel %vm329, %v781, -1e+30
          %v847 = vsel %vm330, %v786, -1e+30
          %v848 = vsel %vm331, %v791, -1e+30
          %v849 = vsel %vm332, %v796, -1e+30
          %v850 = vsel %vm333, %v801, -1e+30
          %v851 = vsel %vm334, %v806, -1e+30
          %v852 = vsel %vm335, %v811, -1e+30
          %v853 = vsel %vm336, %v816, -1e+30
          %v854 = vsel %vm337, %v821, -1e+30
          %v855 = vsel %vm338, %v826, -1e+30
          %v856 = vsel %vm339, %v831, -1e+30
          %v857 = vsel %vm340, %v836, -1e+30
          %v858 = vsel %vm341, %v841, -1e+30
          %v859 = vmax.f32 %v843, %v847
          %v860 = vmax.f32 %v844, %v848
          %v861 = vmax.f32 %v845, %v849
          %v862 = vmax.f32 %v846, %v850
          %v863 = vmax.f32 %v859, %v851
          %v864 = vmax.f32 %v860, %v852
          %v865 = vmax.f32 %v861, %v853
          %v866 = vmax.f32 %v862, %v854
          %v867 = vmax.f32 %v863, %v855
          %v868 = vmax.f32 %v864, %v856
          %v869 = vmax.f32 %v865, %v857
          %v870 = vmax.f32 %v866, %v858
          %v871 = vmax.f32 %v867, %v868
          %v872 = vmax.f32 %v869, %v870
          %v873 = vmax.f32 %v871, %v872
          %v874 = vrot.slane %v873, 4
          %v875 = vmax.f32 %v873, %v874
          %v876 = vrot.slane %v875, 2
          %v877 = vmax.f32 %v875, %v876
          %v878 = vrot.slane %v877, 1
          %v879 = vmax.f32 %v877, %v878
          %v880 = vld [vmem:[#allocation2] sm:$0x1]
          %v881 = vmax.f32 %v880, %v879
          %882 = vst [vmem:[#allocation2] sm:$0x1] %v881
        $region44: #{tpu_custom_call.1} parent=35 // pred_fallthru
          _
        %p883 = scmp.eq.s32.totalorder %s20, 1
        // Predicated region
        $region45: #{tpu_custom_call.1} parent=35 // pred_check
          %p884 = pneg %p883
        $region46: #{tpu_custom_call.1} parent=35 // pred_check_branch
          %886 = sbr.rel (%p884) target = $region48
        $region47: #{tpu_custom_call.1} parent=35 // pred_region
          %v887 = vld [vmem:[#allocation2] sm:$0x1]
          %v889 = vperm.slane %v887, 0
          %v891 = vmul.f32 %v358, %v889
          %v892 = vmul.f32 %v359, %v889
          %v893 = vmul.f32 %v360, %v889
          %v894 = vmul.f32 %v361, %v889
          %v895 = vmul.f32 %v362, %v889
          %v896 = vmul.f32 %v363, %v889
          %v897 = vmul.f32 %v364, %v889
          %v898 = vmul.f32 %v365, %v889
          %v899 = vmul.f32 %v366, %v889
          %v900 = vmul.f32 %v367, %v889
          %v901 = vmul.f32 %v368, %v889
          %v902 = vmul.f32 %v369, %v889
          %v903 = vmul.f32 %v370, %v889
          %v904 = vmul.f32 %v371, %v889
          %v905 = vmul.f32 %v372, %v889
          %v906 = vmul.f32 %v373, %v889
          %907 = vadd.xlane.f32.xlu0 %v891
          %v908 = vpop.xlane.xlu0 %907
          %909 = vadd.xlane.f32.xlu0 %v892
          %v910 = vpop.xlane.xlu0 %909
          %911 = vadd.xlane.f32.xlu0 %v893
          %v912 = vpop.xlane.xlu0 %911
          %913 = vadd.xlane.f32.xlu0 %v894
          %v914 = vpop.xlane.xlu0 %913
          %915 = vadd.xlane.f32.xlu0 %v895
          %v916 = vpop.xlane.xlu0 %915
          %917 = vadd.xlane.f32.xlu0 %v896
          %v918 = vpop.xlane.xlu0 %917
          %919 = vadd.xlane.f32.xlu0 %v897
          %v920 = vpop.xlane.xlu0 %919
          %921 = vadd.xlane.f32.xlu0 %v898
          %v922 = vpop.xlane.xlu0 %921
          %923 = vadd.xlane.f32.xlu0 %v899
          %v924 = vpop.xlane.xlu0 %923
          %925 = vadd.xlane.f32.xlu0 %v900
          %v926 = vpop.xlane.xlu0 %925
          %927 = vadd.xlane.f32.xlu0 %v901
          %v928 = vpop.xlane.xlu0 %927
          %929 = vadd.xlane.f32.xlu0 %v902
          %v930 = vpop.xlane.xlu0 %929
          %931 = vadd.xlane.f32.xlu0 %v903
          %v932 = vpop.xlane.xlu0 %931
          %933 = vadd.xlane.f32.xlu0 %v904
          %v934 = vpop.xlane.xlu0 %933
          %935 = vadd.xlane.f32.xlu0 %v905
          %v936 = vpop.xlane.xlu0 %935
          %937 = vadd.xlane.f32.xlu0 %v906
          %v938 = vpop.xlane.xlu0 %937
          %v939 = vsub.f32 %v744, %v908
          %v940 = vsub.f32 %v745, %v910
          %v941 = vsub.f32 %v746, %v912
          %v942 = vsub.f32 %v747, %v914
          %v943 = vsub.f32 %v748, %v916
          %v944 = vsub.f32 %v749, %v918
          %v945 = vsub.f32 %v750, %v920
          %v946 = vsub.f32 %v751, %v922
          %v947 = vsub.f32 %v752, %v924
          %v948 = vsub.f32 %v753, %v926
          %v949 = vsub.f32 %v754, %v928
          %v950 = vsub.f32 %v755, %v930
          %v951 = vsub.f32 %v756, %v932
          %v952 = vsub.f32 %v757, %v934
          %v953 = vsub.f32 %v758, %v936
          %v954 = vsub.f32 %v759, %v938
          %v955 = vmul.f32 %v939, 1.442695
          %v956 = vpow.pop %v955
          %v957 = vmul.f32 %v940, 1.442695
          %v958 = vpow.pop %v957
          %v959 = vmul.f32 %v941, 1.442695
          %v960 = vpow.pop %v959
          %v961 = vmul.f32 %v942, 1.442695
          %v962 = vpow.pop %v961
          %v963 = vmul.f32 %v943, 1.442695
          %v964 = vpow.pop %v963
          %v965 = vmul.f32 %v944, 1.442695
          %v966 = vpow.pop %v965
          %v967 = vmul.f32 %v945, 1.442695
          %v968 = vpow.pop %v967
          %v969 = vmul.f32 %v946, 1.442695
          %v970 = vpow.pop %v969
          %v971 = vmul.f32 %v947, 1.442695
          %v972 = vpow.pop %v971
          %v973 = vmul.f32 %v948, 1.442695
          %v974 = vpow.pop %v973
          %v975 = vmul.f32 %v949, 1.442695
          %v976 = vpow.pop %v975
          %v977 = vmul.f32 %v950, 1.442695
          %v978 = vpow.pop %v977
          %v979 = vmul.f32 %v951, 1.442695
          %v980 = vpow.pop %v979
          %v981 = vmul.f32 %v952, 1.442695
          %v982 = vpow.pop %v981
          %v983 = vmul.f32 %v953, 1.442695
          %v984 = vpow.pop %v983
          %v985 = vmul.f32 %v954, 1.442695
          %v986 = vpow.pop %v985
          %v987 = vld [vmem:[#allocation3] sm:$0xff]
          %v988 = vld [vmem:[#allocation3 + $0x8] sm:$0xff]
          %v989 = vld [vmem:[#allocation3 + $0x10] sm:$0xff]
          %v990 = vld [vmem:[#allocation3 + $0x18] sm:$0xff]
          %v991 = vld [vmem:[#allocation3 + $0x20] sm:$0xff]
          %v992 = vld [vmem:[#allocation3 + $0x28] sm:$0xff]
          %v993 = vld [vmem:[#allocation3 + $0x30] sm:$0xff]
          %v994 = vld [vmem:[#allocation3 + $0x38] sm:$0xff]
          %v995 = vld [vmem:[#allocation3 + $0x40] sm:$0xff]
          %v996 = vld [vmem:[#allocation3 + $0x48] sm:$0xff]
          %v997 = vld [vmem:[#allocation3 + $0x50] sm:$0xff]
          %v998 = vld [vmem:[#allocation3 + $0x58] sm:$0xff]
          %v999 = vld [vmem:[#allocation3 + $0x60] sm:$0xff]
          %v1000 = vld [vmem:[#allocation3 + $0x68] sm:$0xff]
          %v1001 = vld [vmem:[#allocation3 + $0x70] sm:$0xff]
          %v1002 = vld [vmem:[#allocation3 + $0x78] sm:$0xff]
          %1003 = vxpose.xlu0.b32.start [1/16] %v358, 128
          %1004 = vxpose.xlu0.b32.cont [2/16] %v359, 128
          %1005 = vxpose.xlu0.b32.cont [3/16] %v360, 128
          %1006 = vxpose.xlu0.b32.cont [4/16] %v361, 128
          %1007 = vxpose.xlu0.b32.cont [5/16] %v362, 128
          %1008 = vxpose.xlu0.b32.cont [6/16] %v363, 128
          %1009 = vxpose.xlu0.b32.cont [7/16] %v364, 128
          %1010 = vxpose.xlu0.b32.cont [8/16] %v365, 128
          %1011 = vxpose.xlu0.b32.cont [9/16] %v366, 128
          %1012 = vxpose.xlu0.b32.cont [10/16] %v367, 128
          %1013 = vxpose.xlu0.b32.cont [11/16] %v368, 128
          %1014 = vxpose.xlu0.b32.cont [12/16] %v369, 128
          %1015 = vxpose.xlu0.b32.cont [13/16] %v370, 128
          %1016 = vxpose.xlu0.b32.cont [14/16] %v371, 128
          %1017 = vxpose.xlu0.b32.cont [15/16] %v372, 128
          %1018 = vxpose.xlu0.b32.end [16/16] %v373, 128
          %v1019 = vpop.trf.xlu0
          %v1020 = vpop.trf.xlu0
          %v1021 = vpop.trf.xlu0
          %v1022 = vpop.trf.xlu0
          %v1023 = vpop.trf.xlu0
          %v1024 = vpop.trf.xlu0
          %v1025 = vpop.trf.xlu0
          %v1026 = vpop.trf.xlu0
          %v1027 = vpop.trf.xlu0
          %v1028 = vpop.trf.xlu0
          %v1029 = vpop.trf.xlu0
          %v1030 = vpop.trf.xlu0
          %v1031 = vpop.trf.xlu0
          %v1032 = vpop.trf.xlu0
          %v1033 = vpop.trf.xlu0
          %v1034 = vpop.trf.xlu0
          %1035 = vmatpush.msra.mxu0 %v986
          %1036 = vmatpush.msra.mxu0 %v984
          %1037 = vmatpush.msra.mxu0 %v982
          %1038 = vmatpush.msra.mxu0 %v980
          %1039 = vmatpush.msra.mxu0 %v978
          %1040 = vmatpush.msra.mxu0 %v976
          %1041 = vmatpush.msra.mxu0 %v974
          %1042 = vmatpush.msra.mxu0 %v972
          %1043 = vmatpush.msra.mxu0 %v970
          %1044 = vmatpush.msra.mxu0 %v968
          %1045 = vmatpush.msra.mxu0 %v966
          %1046 = vmatpush.msra.mxu0 %v964
          %1047 = vmatpush.msra.mxu0 %v962
          %1048 = vmatpush.msra.mxu0 %v960
          %1049 = vmatpush.msra.mxu0 %v958
          %1050 = vmatpush.msra.mxu0 %v956
          %1051 = vmatmul.f32.gmra.mxu0 %v1019
          %v1052 = vpop.f32.mrf.mxu0
          %v1053 = vadd.f32 0.0, %v1052
          %1054 = vmatmul.f32.gmra.mxu0 %v1020
          %v1055 = vpop.f32.mrf.mxu0
          %v1056 = vadd.f32 0.0, %v1055
          %1057 = vmatmul.f32.gmra.mxu0 %v1021
          %v1058 = vpop.f32.mrf.mxu0
          %v1059 = vadd.f32 0.0, %v1058
          %1060 = vmatmul.f32.gmra.mxu0 %v1022
          %v1061 = vpop.f32.mrf.mxu0
          %v1062 = vadd.f32 0.0, %v1061
          %1063 = vmatmul.f32.gmra.mxu0 %v1023
          %v1064 = vpop.f32.mrf.mxu0
          %v1065 = vadd.f32 0.0, %v1064
          %1066 = vmatmul.f32.gmra.mxu0 %v1024
          %v1067 = vpop.f32.mrf.mxu0
          %v1068 = vadd.f32 0.0, %v1067
          %1069 = vmatmul.f32.gmra.mxu0 %v1025
          %v1070 = vpop.f32.mrf.mxu0
          %v1071 = vadd.f32 0.0, %v1070
          %1072 = vmatmul.f32.gmra.mxu0 %v1026
          %v1073 = vpop.f32.mrf.mxu0
          %v1074 = vadd.f32 0.0, %v1073
          %1075 = vmatmul.f32.gmra.mxu0 %v1027
          %v1076 = vpop.f32.mrf.mxu0
          %v1077 = vadd.f32 0.0, %v1076
          %1078 = vmatmul.f32.gmra.mxu0 %v1028
          %v1079 = vpop.f32.mrf.mxu0
          %v1080 = vadd.f32 0.0, %v1079
          %1081 = vmatmul.f32.gmra.mxu0 %v1029
          %v1082 = vpop.f32.mrf.mxu0
          %v1083 = vadd.f32 0.0, %v1082
          %1084 = vmatmul.f32.gmra.mxu0 %v1030
          %v1085 = vpop.f32.mrf.mxu0
          %v1086 = vadd.f32 0.0, %v1085
          %1087 = vmatmul.f32.gmra.mxu0 %v1031
          %v1088 = vpop.f32.mrf.mxu0
          %v1089 = vadd.f32 0.0, %v1088
          %1090 = vmatmul.f32.gmra.mxu0 %v1032
          %v1091 = vpop.f32.mrf.mxu0
          %v1092 = vadd.f32 0.0, %v1091
          %1093 = vmatmul.f32.gmra.mxu0 %v1033
          %v1094 = vpop.f32.mrf.mxu0
          %v1095 = vadd.f32 0.0, %v1094
          %1096 = vmatmul.f32.gmra.mxu0 %v1034
          %v1097 = vpop.f32.mrf.mxu0
          %v1098 = vadd.f32 0.0, %v1097
          %1099 = vdwg.mxu0
          %v1100 = vadd.f32 %v987, %v1053
          %v1101 = vadd.f32 %v988, %v1056
          %v1102 = vadd.f32 %v989, %v1059
          %v1103 = vadd.f32 %v990, %v1062
          %v1104 = vadd.f32 %v991, %v1065
          %v1105 = vadd.f32 %v992, %v1068
          %v1106 = vadd.f32 %v993, %v1071
          %v1107 = vadd.f32 %v994, %v1074
          %v1108 = vadd.f32 %v995, %v1077
          %v1109 = vadd.f32 %v996, %v1080
          %v1110 = vadd.f32 %v997, %v1083
          %v1111 = vadd.f32 %v998, %v1086
          %v1112 = vadd.f32 %v999, %v1089
          %v1113 = vadd.f32 %v1000, %v1092
          %v1114 = vadd.f32 %v1001, %v1095
          %v1115 = vadd.f32 %v1002, %v1098
          %vm1116 = vcmask 7168
          %1117 = vst.msk [vmem:[#allocation3] sm:$0xff] %vm1116, %v1100
          %1118 = vst.msk [vmem:[#allocation3 + $0x8] sm:$0xff] %vm1116, %v1101
          %1119 = vst.msk [vmem:[#allocation3 + $0x10] sm:$0xff] %vm1116, %v1102
          %1120 = vst.msk [vmem:[#allocation3 + $0x18] sm:$0xff] %vm1116, %v1103
          %1121 = vst.msk [vmem:[#allocation3 + $0x20] sm:$0xff] %vm1116, %v1104
          %1122 = vst.msk [vmem:[#allocation3 + $0x28] sm:$0xff] %vm1116, %v1105
          %1123 = vst.msk [vmem:[#allocation3 + $0x30] sm:$0xff] %vm1116, %v1106
          %1124 = vst.msk [vmem:[#allocation3 + $0x38] sm:$0xff] %vm1116, %v1107
          %1125 = vst.msk [vmem:[#allocation3 + $0x40] sm:$0xff] %vm1116, %v1108
          %1126 = vst.msk [vmem:[#allocation3 + $0x48] sm:$0xff] %vm1116, %v1109
          %1127 = vst.msk [vmem:[#allocation3 + $0x50] sm:$0xff] %vm1116, %v1110
          %1128 = vst.msk [vmem:[#allocation3 + $0x58] sm:$0xff] %vm1116, %v1111
          %1129 = vst.msk [vmem:[#allocation3 + $0x60] sm:$0xff] %vm1116, %v1112
          %1130 = vst.msk [vmem:[#allocation3 + $0x68] sm:$0xff] %vm1116, %v1113
          %1131 = vst.msk [vmem:[#allocation3 + $0x70] sm:$0xff] %vm1116, %v1114
          %1132 = vst.msk [vmem:[#allocation3 + $0x78] sm:$0xff] %vm1116, %v1115
        $region48: #{tpu_custom_call.1} parent=35 // pred_fallthru
          _
        %p1133 = scmp.eq.s32.totalorder %s20, 2
        // Predicated region
        $region49: #{tpu_custom_call.1} parent=35 // pred_check
          %p1134 = pneg %p1133
        $region50: #{tpu_custom_call.1} parent=35 // pred_check_branch
          %1136 = sbr.rel (%p1134) target = $region52
        $region51: #{tpu_custom_call.1} parent=35 // pred_region
          %v1137 = vld [vmem:[#allocation2] sm:$0x1]
          %v1139 = vperm.slane %v1137, 0
          %v1141 = vmul.f32 %v358, %v1139
          %v1142 = vmul.f32 %v359, %v1139
          %v1143 = vmul.f32 %v360, %v1139
          %v1144 = vmul.f32 %v361, %v1139
          %v1145 = vmul.f32 %v362, %v1139
          %v1146 = vmul.f32 %v363, %v1139
          %v1147 = vmul.f32 %v364, %v1139
          %v1148 = vmul.f32 %v365, %v1139
          %v1149 = vmul.f32 %v366, %v1139
          %v1150 = vmul.f32 %v367, %v1139
          %v1151 = vmul.f32 %v368, %v1139
          %v1152 = vmul.f32 %v369, %v1139
          %v1153 = vmul.f32 %v370, %v1139
          %v1154 = vmul.f32 %v371, %v1139
          %v1155 = vmul.f32 %v372, %v1139
          %v1156 = vmul.f32 %v373, %v1139
          %1157 = vadd.xlane.f32.xlu0 %v1141
          %v1158 = vpop.xlane.xlu0 %1157
          %1159 = vadd.xlane.f32.xlu0 %v1142
          %v1160 = vpop.xlane.xlu0 %1159
          %1161 = vadd.xlane.f32.xlu0 %v1143
          %v1162 = vpop.xlane.xlu0 %1161
          %1163 = vadd.xlane.f32.xlu0 %v1144
          %v1164 = vpop.xlane.xlu0 %1163
          %1165 = vadd.xlane.f32.xlu0 %v1145
          %v1166 = vpop.xlane.xlu0 %1165
          %1167 = vadd.xlane.f32.xlu0 %v1146
          %v1168 = vpop.xlane.xlu0 %1167
          %1169 = vadd.xlane.f32.xlu0 %v1147
          %v1170 = vpop.xlane.xlu0 %1169
          %1171 = vadd.xlane.f32.xlu0 %v1148
          %v1172 = vpop.xlane.xlu0 %1171
          %1173 = vadd.xlane.f32.xlu0 %v1149
          %v1174 = vpop.xlane.xlu0 %1173
          %1175 = vadd.xlane.f32.xlu0 %v1150
          %v1176 = vpop.xlane.xlu0 %1175
          %1177 = vadd.xlane.f32.xlu0 %v1151
          %v1178 = vpop.xlane.xlu0 %1177
          %1179 = vadd.xlane.f32.xlu0 %v1152
          %v1180 = vpop.xlane.xlu0 %1179
          %1181 = vadd.xlane.f32.xlu0 %v1153
          %v1182 = vpop.xlane.xlu0 %1181
          %1183 = vadd.xlane.f32.xlu0 %v1154
          %v1184 = vpop.xlane.xlu0 %1183
          %1185 = vadd.xlane.f32.xlu0 %v1155
          %v1186 = vpop.xlane.xlu0 %1185
          %1187 = vadd.xlane.f32.xlu0 %v1156
          %v1188 = vpop.xlane.xlu0 %1187
          %v1189 = vld [vmem:[#allocation3] sm:$0xff]
          %v1190 = vld [vmem:[#allocation3 + $0x8] sm:$0xff]
          %v1191 = vld [vmem:[#allocation3 + $0x10] sm:$0xff]
          %v1192 = vld [vmem:[#allocation3 + $0x18] sm:$0xff]
          %v1193 = vld [vmem:[#allocation3 + $0x20] sm:$0xff]
          %v1194 = vld [vmem:[#allocation3 + $0x28] sm:$0xff]
          %v1195 = vld [vmem:[#allocation3 + $0x30] sm:$0xff]
          %v1196 = vld [vmem:[#allocation3 + $0x38] sm:$0xff]
          %v1197 = vld [vmem:[#allocation3 + $0x40] sm:$0xff]
          %v1198 = vld [vmem:[#allocation3 + $0x48] sm:$0xff]
          %v1199 = vld [vmem:[#allocation3 + $0x50] sm:$0xff]
          %v1200 = vld [vmem:[#allocation3 + $0x58] sm:$0xff]
          %v1201 = vld [vmem:[#allocation3 + $0x60] sm:$0xff]
          %v1202 = vld [vmem:[#allocation3 + $0x68] sm:$0xff]
          %v1203 = vld [vmem:[#allocation3 + $0x70] sm:$0xff]
          %v1204 = vld [vmem:[#allocation3 + $0x78] sm:$0xff]
          %v1205 = vsub.f32 %v744, %v1158
          %v1206 = vsub.f32 %v745, %v1160
          %v1207 = vsub.f32 %v746, %v1162
          %v1208 = vsub.f32 %v747, %v1164
          %v1209 = vsub.f32 %v748, %v1166
          %v1210 = vsub.f32 %v749, %v1168
          %v1211 = vsub.f32 %v750, %v1170
          %v1212 = vsub.f32 %v751, %v1172
          %v1213 = vsub.f32 %v752, %v1174
          %v1214 = vsub.f32 %v753, %v1176
          %v1215 = vsub.f32 %v754, %v1178
          %v1216 = vsub.f32 %v755, %v1180
          %v1217 = vsub.f32 %v756, %v1182
          %v1218 = vsub.f32 %v757, %v1184
          %v1219 = vsub.f32 %v758, %v1186
          %v1220 = vsub.f32 %v759, %v1188
          %v1221 = vmul.f32 %v1205, 1.442695
          %v1222 = vpow.pop %v1221
          %v1223 = vmul.f32 %v1206, 1.442695
          %v1224 = vpow.pop %v1223
          %v1225 = vmul.f32 %v1207, 1.442695
          %v1226 = vpow.pop %v1225
          %v1227 = vmul.f32 %v1208, 1.442695
          %v1228 = vpow.pop %v1227
          %v1229 = vmul.f32 %v1209, 1.442695
          %v1230 = vpow.pop %v1229
          %v1231 = vmul.f32 %v1210, 1.442695
          %v1232 = vpow.pop %v1231
          %v1233 = vmul.f32 %v1211, 1.442695
          %v1234 = vpow.pop %v1233
          %v1235 = vmul.f32 %v1212, 1.442695
          %v1236 = vpow.pop %v1235
          %v1237 = vmul.f32 %v1213, 1.442695
          %v1238 = vpow.pop %v1237
          %v1239 = vmul.f32 %v1214, 1.442695
          %v1240 = vpow.pop %v1239
          %v1241 = vmul.f32 %v1215, 1.442695
          %v1242 = vpow.pop %v1241
          %v1243 = vmul.f32 %v1216, 1.442695
          %v1244 = vpow.pop %v1243
          %v1245 = vmul.f32 %v1217, 1.442695
          %v1246 = vpow.pop %v1245
          %v1247 = vmul.f32 %v1218, 1.442695
          %v1248 = vpow.pop %v1247
          %v1249 = vmul.f32 %v1219, 1.442695
          %v1250 = vpow.pop %v1249
          %v1251 = vmul.f32 %v1220, 1.442695
          %v1252 = vpow.pop %v1251
          %1253 = vmatpush.msra.mxu0 %v1204
          %1254 = vmatpush.msra.mxu0 %v1203
          %1255 = vmatpush.msra.mxu0 %v1202
          %1256 = vmatpush.msra.mxu0 %v1201
          %1257 = vmatpush.msra.mxu0 %v1200
          %1258 = vmatpush.msra.mxu0 %v1199
          %1259 = vmatpush.msra.mxu0 %v1198
          %1260 = vmatpush.msra.mxu0 %v1197
          %1261 = vmatpush.msra.mxu0 %v1196
          %1262 = vmatpush.msra.mxu0 %v1195
          %1263 = vmatpush.msra.mxu0 %v1194
          %1264 = vmatpush.msra.mxu0 %v1193
          %1265 = vmatpush.msra.mxu0 %v1192
          %1266 = vmatpush.msra.mxu0 %v1191
          %1267 = vmatpush.msra.mxu0 %v1190
          %1268 = vmatpush.msra.mxu0 %v1189
          %1269 = vmatmul.f32.gmra.mxu0 %v358
          %v1270 = vpop.f32.mrf.mxu0
          %v1271 = vadd.f32 1e-16, %v1270
          %1272 = vmatmul.f32.gmra.mxu0 %v359
          %v1273 = vpop.f32.mrf.mxu0
          %v1274 = vadd.f32 1e-16, %v1273
          %1275 = vmatmul.f32.gmra.mxu0 %v360
          %v1276 = vpop.f32.mrf.mxu0
          %v1277 = vadd.f32 1e-16, %v1276
          %1278 = vmatmul.f32.gmra.mxu0 %v361
          %v1279 = vpop.f32.mrf.mxu0
          %v1280 = vadd.f32 1e-16, %v1279
          %1281 = vmatmul.f32.gmra.mxu0 %v362
          %v1282 = vpop.f32.mrf.mxu0
          %v1283 = vadd.f32 1e-16, %v1282
          %1284 = vmatmul.f32.gmra.mxu0 %v363
          %v1285 = vpop.f32.mrf.mxu0
          %v1286 = vadd.f32 1e-16, %v1285
          %1287 = vmatmul.f32.gmra.mxu0 %v364
          %v1288 = vpop.f32.mrf.mxu0
          %v1289 = vadd.f32 1e-16, %v1288
          %1290 = vmatmul.f32.gmra.mxu0 %v365
          %v1291 = vpop.f32.mrf.mxu0
          %v1292 = vadd.f32 1e-16, %v1291
          %1293 = vmatmul.f32.gmra.mxu0 %v366
          %v1294 = vpop.f32.mrf.mxu0
          %v1295 = vadd.f32 1e-16, %v1294
          %1296 = vmatmul.f32.gmra.mxu0 %v367
          %v1297 = vpop.f32.mrf.mxu0
          %v1298 = vadd.f32 1e-16, %v1297
          %1299 = vmatmul.f32.gmra.mxu0 %v368
          %v1300 = vpop.f32.mrf.mxu0
          %v1301 = vadd.f32 1e-16, %v1300
          %1302 = vmatmul.f32.gmra.mxu0 %v369
          %v1303 = vpop.f32.mrf.mxu0
          %v1304 = vadd.f32 1e-16, %v1303
          %1305 = vmatmul.f32.gmra.mxu0 %v370
          %v1306 = vpop.f32.mrf.mxu0
          %v1307 = vadd.f32 1e-16, %v1306
          %1308 = vmatmul.f32.gmra.mxu0 %v371
          %v1309 = vpop.f32.mrf.mxu0
          %v1310 = vadd.f32 1e-16, %v1309
          %1311 = vmatmul.f32.gmra.mxu0 %v372
          %v1312 = vpop.f32.mrf.mxu0
          %v1313 = vadd.f32 1e-16, %v1312
          %1314 = vmatmul.f32.gmra.mxu0 %v373
          %v1315 = vpop.f32.mrf.mxu0
          %v1316 = vadd.f32 1e-16, %v1315
          %1317 = vdwg.mxu0
          %v1318 = vrcp.pop %v1271
          %v1319 = vmul.f32 %v1271, %v1318
          %v1320 = vsub.f32 1.0, %v1319
          %v1321 = vmul.f32 %v1318, %v1320
          %v1322 = vadd.f32 %v1318, %v1321
          %vm1323 = vweird.f32 %v1271
          %vm1324 = vweird.f32 %v1318
          %vm1325 = vmor %vm1323, %vm1324
          %v1326 = vsel %vm1325, %v1318, %v1322
          %v1327 = vand.u32 2147483647, %v1271
          %vm1328 = vcmp.eq.f32.partialorder %v1327, 8.507059e+37
          %v1329 = vand.u32 %v1271, 2147483648
          %v1330 = vor.u32 1.1754944e-38, %v1329
          %v1331 = vsel %vm1328, %v1330, %v1326
          %v1332 = vmul.f32 %v1222, %v1331
          %v1333 = vrcp.pop %v1274
          %v1334 = vmul.f32 %v1274, %v1333
          %v1335 = vsub.f32 1.0, %v1334
          %v1336 = vmul.f32 %v1333, %v1335
          %v1337 = vadd.f32 %v1333, %v1336
          %vm1338 = vweird.f32 %v1274
          %vm1339 = vweird.f32 %v1333
          %vm1340 = vmor %vm1338, %vm1339
          %v1341 = vsel %vm1340, %v1333, %v1337
          %v1342 = vand.u32 2147483647, %v1274
          %vm1343 = vcmp.eq.f32.partialorder %v1342, 8.507059e+37
          %v1344 = vand.u32 %v1274, 2147483648
          %v1345 = vor.u32 1.1754944e-38, %v1344
          %v1346 = vsel %vm1343, %v1345, %v1341
          %v1347 = vmul.f32 %v1224, %v1346
          %v1348 = vrcp.pop %v1277
          %v1349 = vmul.f32 %v1277, %v1348
          %v1350 = vsub.f32 1.0, %v1349
          %v1351 = vmul.f32 %v1348, %v1350
          %v1352 = vadd.f32 %v1348, %v1351
          %vm1353 = vweird.f32 %v1277
          %vm1354 = vweird.f32 %v1348
          %vm1355 = vmor %vm1353, %vm1354
          %v1356 = vsel %vm1355, %v1348, %v1352
          %v1357 = vand.u32 2147483647, %v1277
          %vm1358 = vcmp.eq.f32.partialorder %v1357, 8.507059e+37
          %v1359 = vand.u32 %v1277, 2147483648
          %v1360 = vor.u32 1.1754944e-38, %v1359
          %v1361 = vsel %vm1358, %v1360, %v1356
          %v1362 = vmul.f32 %v1226, %v1361
          %v1363 = vrcp.pop %v1280
          %v1364 = vmul.f32 %v1280, %v1363
          %v1365 = vsub.f32 1.0, %v1364
          %v1366 = vmul.f32 %v1363, %v1365
          %v1367 = vadd.f32 %v1363, %v1366
          %vm1368 = vweird.f32 %v1280
          %vm1369 = vweird.f32 %v1363
          %vm1370 = vmor %vm1368, %vm1369
          %v1371 = vsel %vm1370, %v1363, %v1367
          %v1372 = vand.u32 2147483647, %v1280
          %vm1373 = vcmp.eq.f32.partialorder %v1372, 8.507059e+37
          %v1374 = vand.u32 %v1280, 2147483648
          %v1375 = vor.u32 1.1754944e-38, %v1374
          %v1376 = vsel %vm1373, %v1375, %v1371
          %v1377 = vmul.f32 %v1228, %v1376
          %v1378 = vrcp.pop %v1283
          %v1379 = vmul.f32 %v1283, %v1378
          %v1380 = vsub.f32 1.0, %v1379
          %v1381 = vmul.f32 %v1378, %v1380
          %v1382 = vadd.f32 %v1378, %v1381
          %vm1383 = vweird.f32 %v1283
          %vm1384 = vweird.f32 %v1378
          %vm1385 = vmor %vm1383, %vm1384
          %v1386 = vsel %vm1385, %v1378, %v1382
          %v1387 = vand.u32 2147483647, %v1283
          %vm1388 = vcmp.eq.f32.partialorder %v1387, 8.507059e+37
          %v1389 = vand.u32 %v1283, 2147483648
          %v1390 = vor.u32 1.1754944e-38, %v1389
          %v1391 = vsel %vm1388, %v1390, %v1386
          %v1392 = vmul.f32 %v1230, %v1391
          %v1393 = vrcp.pop %v1286
          %v1394 = vmul.f32 %v1286, %v1393
          %v1395 = vsub.f32 1.0, %v1394
          %v1396 = vmul.f32 %v1393, %v1395
          %v1397 = vadd.f32 %v1393, %v1396
          %vm1398 = vweird.f32 %v1286
          %vm1399 = vweird.f32 %v1393
          %vm1400 = vmor %vm1398, %vm1399
          %v1401 = vsel %vm1400, %v1393, %v1397
          %v1402 = vand.u32 2147483647, %v1286
          %vm1403 = vcmp.eq.f32.partialorder %v1402, 8.507059e+37
          %v1404 = vand.u32 %v1286, 2147483648
          %v1405 = vor.u32 1.1754944e-38, %v1404
          %v1406 = vsel %vm1403, %v1405, %v1401
          %v1407 = vmul.f32 %v1232, %v1406
          %v1408 = vrcp.pop %v1289
          %v1409 = vmul.f32 %v1289, %v1408
          %v1410 = vsub.f32 1.0, %v1409
          %v1411 = vmul.f32 %v1408, %v1410
          %v1412 = vadd.f32 %v1408, %v1411
          %vm1413 = vweird.f32 %v1289
          %vm1414 = vweird.f32 %v1408
          %vm1415 = vmor %vm1413, %vm1414
          %v1416 = vsel %vm1415, %v1408, %v1412
          %v1417 = vand.u32 2147483647, %v1289
          %vm1418 = vcmp.eq.f32.partialorder %v1417, 8.507059e+37
          %v1419 = vand.u32 %v1289, 2147483648
          %v1420 = vor.u32 1.1754944e-38, %v1419
          %v1421 = vsel %vm1418, %v1420, %v1416
          %v1422 = vmul.f32 %v1234, %v1421
          %v1423 = vrcp.pop %v1292
          %v1424 = vmul.f32 %v1292, %v1423
          %v1425 = vsub.f32 1.0, %v1424
          %v1426 = vmul.f32 %v1423, %v1425
          %v1427 = vadd.f32 %v1423, %v1426
          %vm1428 = vweird.f32 %v1292
          %vm1429 = vweird.f32 %v1423
          %vm1430 = vmor %vm1428, %vm1429
          %v1431 = vsel %vm1430, %v1423, %v1427
          %v1432 = vand.u32 2147483647, %v1292
          %vm1433 = vcmp.eq.f32.partialorder %v1432, 8.507059e+37
          %v1434 = vand.u32 %v1292, 2147483648
          %v1435 = vor.u32 1.1754944e-38, %v1434
          %v1436 = vsel %vm1433, %v1435, %v1431
          %v1437 = vmul.f32 %v1236, %v1436
          %v1438 = vrcp.pop %v1295
          %v1439 = vmul.f32 %v1295, %v1438
          %v1440 = vsub.f32 1.0, %v1439
          %v1441 = vmul.f32 %v1438, %v1440
          %v1442 = vadd.f32 %v1438, %v1441
          %vm1443 = vweird.f32 %v1295
          %vm1444 = vweird.f32 %v1438
          %vm1445 = vmor %vm1443, %vm1444
          %v1446 = vsel %vm1445, %v1438, %v1442
          %v1447 = vand.u32 2147483647, %v1295
          %vm1448 = vcmp.eq.f32.partialorder %v1447, 8.507059e+37
          %v1449 = vand.u32 %v1295, 2147483648
          %v1450 = vor.u32 1.1754944e-38, %v1449
          %v1451 = vsel %vm1448, %v1450, %v1446
          %v1452 = vmul.f32 %v1238, %v1451
          %v1453 = vrcp.pop %v1298
          %v1454 = vmul.f32 %v1298, %v1453
          %v1455 = vsub.f32 1.0, %v1454
          %v1456 = vmul.f32 %v1453, %v1455
          %v1457 = vadd.f32 %v1453, %v1456
          %vm1458 = vweird.f32 %v1298
          %vm1459 = vweird.f32 %v1453
          %vm1460 = vmor %vm1458, %vm1459
          %v1461 = vsel %vm1460, %v1453, %v1457
          %v1462 = vand.u32 2147483647, %v1298
          %vm1463 = vcmp.eq.f32.partialorder %v1462, 8.507059e+37
          %v1464 = vand.u32 %v1298, 2147483648
          %v1465 = vor.u32 1.1754944e-38, %v1464
          %v1466 = vsel %vm1463, %v1465, %v1461
          %v1467 = vmul.f32 %v1240, %v1466
          %v1468 = vrcp.pop %v1301
          %v1469 = vmul.f32 %v1301, %v1468
          %v1470 = vsub.f32 1.0, %v1469
          %v1471 = vmul.f32 %v1468, %v1470
          %v1472 = vadd.f32 %v1468, %v1471
          %vm1473 = vweird.f32 %v1301
          %vm1474 = vweird.f32 %v1468
          %vm1475 = vmor %vm1473, %vm1474
          %v1476 = vsel %vm1475, %v1468, %v1472
          %v1477 = vand.u32 2147483647, %v1301
          %vm1478 = vcmp.eq.f32.partialorder %v1477, 8.507059e+37
          %v1479 = vand.u32 %v1301, 2147483648
          %v1480 = vor.u32 1.1754944e-38, %v1479
          %v1481 = vsel %vm1478, %v1480, %v1476
          %v1482 = vmul.f32 %v1242, %v1481
          %v1483 = vrcp.pop %v1304
          %v1484 = vmul.f32 %v1304, %v1483
          %v1485 = vsub.f32 1.0, %v1484
          %v1486 = vmul.f32 %v1483, %v1485
          %v1487 = vadd.f32 %v1483, %v1486
          %vm1488 = vweird.f32 %v1304
          %vm1489 = vweird.f32 %v1483
          %vm1490 = vmor %vm1488, %vm1489
          %v1491 = vsel %vm1490, %v1483, %v1487
          %v1492 = vand.u32 2147483647, %v1304
          %vm1493 = vcmp.eq.f32.partialorder %v1492, 8.507059e+37
          %v1494 = vand.u32 %v1304, 2147483648
          %v1495 = vor.u32 1.1754944e-38, %v1494
          %v1496 = vsel %vm1493, %v1495, %v1491
          %v1497 = vmul.f32 %v1244, %v1496
          %v1498 = vrcp.pop %v1307
          %v1499 = vmul.f32 %v1307, %v1498
          %v1500 = vsub.f32 1.0, %v1499
          %v1501 = vmul.f32 %v1498, %v1500
          %v1502 = vadd.f32 %v1498, %v1501
          %vm1503 = vweird.f32 %v1307
          %vm1504 = vweird.f32 %v1498
          %vm1505 = vmor %vm1503, %vm1504
          %v1506 = vsel %vm1505, %v1498, %v1502
          %v1507 = vand.u32 2147483647, %v1307
          %vm1508 = vcmp.eq.f32.partialorder %v1507, 8.507059e+37
          %v1509 = vand.u32 %v1307, 2147483648
          %v1510 = vor.u32 1.1754944e-38, %v1509
          %v1511 = vsel %vm1508, %v1510, %v1506
          %v1512 = vmul.f32 %v1246, %v1511
          %v1513 = vrcp.pop %v1310
          %v1514 = vmul.f32 %v1310, %v1513
          %v1515 = vsub.f32 1.0, %v1514
          %v1516 = vmul.f32 %v1513, %v1515
          %v1517 = vadd.f32 %v1513, %v1516
          %vm1518 = vweird.f32 %v1310
          %vm1519 = vweird.f32 %v1513
          %vm1520 = vmor %vm1518, %vm1519
          %v1521 = vsel %vm1520, %v1513, %v1517
          %v1522 = vand.u32 2147483647, %v1310
          %vm1523 = vcmp.eq.f32.partialorder %v1522, 8.507059e+37
          %v1524 = vand.u32 %v1310, 2147483648
          %v1525 = vor.u32 1.1754944e-38, %v1524
          %v1526 = vsel %vm1523, %v1525, %v1521
          %v1527 = vmul.f32 %v1248, %v1526
          %v1528 = vrcp.pop %v1313
          %v1529 = vmul.f32 %v1313, %v1528
          %v1530 = vsub.f32 1.0, %v1529
          %v1531 = vmul.f32 %v1528, %v1530
          %v1532 = vadd.f32 %v1528, %v1531
          %vm1533 = vweird.f32 %v1313
          %vm1534 = vweird.f32 %v1528
          %vm1535 = vmor %vm1533, %vm1534
          %v1536 = vsel %vm1535, %v1528, %v1532
          %v1537 = vand.u32 2147483647, %v1313
          %vm1538 = vcmp.eq.f32.partialorder %v1537, 8.507059e+37
          %v1539 = vand.u32 %v1313, 2147483648
          %v1540 = vor.u32 1.1754944e-38, %v1539
          %v1541 = vsel %vm1538, %v1540, %v1536
          %v1542 = vmul.f32 %v1250, %v1541
          %v1543 = vrcp.pop %v1316
          %v1544 = vmul.f32 %v1316, %v1543
          %v1545 = vsub.f32 1.0, %v1544
          %v1546 = vmul.f32 %v1543, %v1545
          %v1547 = vadd.f32 %v1543, %v1546
          %vm1548 = vweird.f32 %v1316
          %vm1549 = vweird.f32 %v1543
          %vm1550 = vmor %vm1548, %vm1549
          %v1551 = vsel %vm1550, %v1543, %v1547
          %v1552 = vand.u32 2147483647, %v1316
          %vm1553 = vcmp.eq.f32.partialorder %v1552, 8.507059e+37
          %v1554 = vand.u32 %v1316, 2147483648
          %v1555 = vor.u32 1.1754944e-38, %v1554
          %v1556 = vsel %vm1553, %v1555, %v1551
          %v1557 = vmul.f32 %v1252, %v1556
          %v1558 = vld [vmem:[%s3] sm:$0xff]
          %v1559 = vld [vmem:[%s3 + $0x8] sm:$0xff]
          %v1560 = vld [vmem:[%s3 + $0x10] sm:$0xff]
          %v1561 = vld [vmem:[%s3 + $0x18] sm:$0xff]
          %v1562 = vld [vmem:[%s3 + $0x20] sm:$0xff]
          %v1563 = vld [vmem:[%s3 + $0x28] sm:$0xff]
          %v1564 = vld [vmem:[%s3 + $0x30] sm:$0xff]
          %v1565 = vld [vmem:[%s3 + $0x38] sm:$0xff]
          %v1566 = vld [vmem:[%s3 + $0x40] sm:$0xff]
          %v1567 = vld [vmem:[%s3 + $0x48] sm:$0xff]
          %v1568 = vld [vmem:[%s3 + $0x50] sm:$0xff]
          %v1569 = vld [vmem:[%s3 + $0x58] sm:$0xff]
          %v1570 = vld [vmem:[%s3 + $0x60] sm:$0xff]
          %v1571 = vld [vmem:[%s3 + $0x68] sm:$0xff]
          %v1572 = vld [vmem:[%s3 + $0x70] sm:$0xff]
          %v1573 = vld [vmem:[%s3 + $0x78] sm:$0xff]
          %1574 = vmatpush.msra.mxu0 %v1573
          %1575 = vmatpush.msra.mxu0 %v1572
          %1576 = vmatpush.msra.mxu0 %v1571
          %1577 = vmatpush.msra.mxu0 %v1570
          %1578 = vmatpush.msra.mxu0 %v1569
          %1579 = vmatpush.msra.mxu0 %v1568
          %1580 = vmatpush.msra.mxu0 %v1567
          %1581 = vmatpush.msra.mxu0 %v1566
          %1582 = vmatpush.msra.mxu0 %v1565
          %1583 = vmatpush.msra.mxu0 %v1564
          %1584 = vmatpush.msra.mxu0 %v1563
          %1585 = vmatpush.msra.mxu0 %v1562
          %1586 = vmatpush.msra.mxu0 %v1561
          %1587 = vmatpush.msra.mxu0 %v1560
          %1588 = vmatpush.msra.mxu0 %v1559
          %1589 = vmatpush.msra.mxu0 %v1558
          %1590 = vmatmul.f32.gmra.mxu0 %v358
          %v1591 = vpop.f32.mrf.mxu0
          %v1592 = vadd.f32 0.0, %v1591
          %1593 = vmatmul.f32.gmra.mxu0 %v359
          %v1594 = vpop.f32.mrf.mxu0
          %v1595 = vadd.f32 0.0, %v1594
          %1596 = vmatmul.f32.gmra.mxu0 %v360
          %v1597 = vpop.f32.mrf.mxu0
          %v1598 = vadd.f32 0.0, %v1597
          %1599 = vmatmul.f32.gmra.mxu0 %v361
          %v1600 = vpop.f32.mrf.mxu0
          %v1601 = vadd.f32 0.0, %v1600
          %1602 = vmatmul.f32.gmra.mxu0 %v362
          %v1603 = vpop.f32.mrf.mxu0
          %v1604 = vadd.f32 0.0, %v1603
          %1605 = vmatmul.f32.gmra.mxu0 %v363
          %v1606 = vpop.f32.mrf.mxu0
          %v1607 = vadd.f32 0.0, %v1606
          %1608 = vmatmul.f32.gmra.mxu0 %v364
          %v1609 = vpop.f32.mrf.mxu0
          %v1610 = vadd.f32 0.0, %v1609
          %1611 = vmatmul.f32.gmra.mxu0 %v365
          %v1612 = vpop.f32.mrf.mxu0
          %v1613 = vadd.f32 0.0, %v1612
          %1614 = vmatmul.f32.gmra.mxu0 %v366
          %v1615 = vpop.f32.mrf.mxu0
          %v1616 = vadd.f32 0.0, %v1615
          %1617 = vmatmul.f32.gmra.mxu0 %v367
          %v1618 = vpop.f32.mrf.mxu0
          %v1619 = vadd.f32 0.0, %v1618
          %1620 = vmatmul.f32.gmra.mxu0 %v368
          %v1621 = vpop.f32.mrf.mxu0
          %v1622 = vadd.f32 0.0, %v1621
          %1623 = vmatmul.f32.gmra.mxu0 %v369
          %v1624 = vpop.f32.mrf.mxu0
          %v1625 = vadd.f32 0.0, %v1624
          %1626 = vmatmul.f32.gmra.mxu0 %v370
          %v1627 = vpop.f32.mrf.mxu0
          %v1628 = vadd.f32 0.0, %v1627
          %1629 = vmatmul.f32.gmra.mxu0 %v371
          %v1630 = vpop.f32.mrf.mxu0
          %v1631 = vadd.f32 0.0, %v1630
          %1632 = vmatmul.f32.gmra.mxu0 %v372
          %v1633 = vpop.f32.mrf.mxu0
          %v1634 = vadd.f32 0.0, %v1633
          %1635 = vmatmul.f32.gmra.mxu0 %v373
          %v1636 = vpop.f32.mrf.mxu0
          %v1637 = vadd.f32 0.0, %v1636
          %1638 = vdwg.mxu0
          %v1639 = vld [vmem:[#allocation4] sm:$0xff]
          %v1640 = vld [vmem:[#allocation4 + $0x8] sm:$0xff]
          %v1641 = vld [vmem:[#allocation4 + $0x10] sm:$0xff]
          %v1642 = vld [vmem:[#allocation4 + $0x18] sm:$0xff]
          %v1643 = vld [vmem:[#allocation4 + $0x20] sm:$0xff]
          %v1644 = vld [vmem:[#allocation4 + $0x28] sm:$0xff]
          %v1645 = vld [vmem:[#allocation4 + $0x30] sm:$0xff]
          %v1646 = vld [vmem:[#allocation4 + $0x38] sm:$0xff]
          %v1647 = vld [vmem:[#allocation4 + $0x40] sm:$0xff]
          %v1648 = vld [vmem:[#allocation4 + $0x48] sm:$0xff]
          %v1649 = vld [vmem:[#allocation4 + $0x50] sm:$0xff]
          %v1650 = vld [vmem:[#allocation4 + $0x58] sm:$0xff]
          %v1651 = vld [vmem:[#allocation4 + $0x60] sm:$0xff]
          %v1652 = vld [vmem:[#allocation4 + $0x68] sm:$0xff]
          %v1653 = vld [vmem:[#allocation4 + $0x70] sm:$0xff]
          %v1654 = vld [vmem:[#allocation4 + $0x78] sm:$0xff]
          %1656 = vset.pattern.permute.xlu0 0
          %1657 = vperm.xlu0 %1656, %v1332
          %v1658 = vpop.permute.xlu0 %1657
          %1661 = vset.pattern.permute.xlu0 0
          %1662 = vperm.xlu0 %1661, %v1347
          %v1663 = vpop.permute.xlu0 %1662
          %1666 = vset.pattern.permute.xlu0 0
          %1667 = vperm.xlu0 %1666, %v1362
          %v1668 = vpop.permute.xlu0 %1667
          %1671 = vset.pattern.permute.xlu0 0
          %1672 = vperm.xlu0 %1671, %v1377
          %v1673 = vpop.permute.xlu0 %1672
          %1676 = vset.pattern.permute.xlu0 0
          %1677 = vperm.xlu0 %1676, %v1392
          %v1678 = vpop.permute.xlu0 %1677
          %1681 = vset.pattern.permute.xlu0 0
          %1682 = vperm.xlu0 %1681, %v1407
          %v1683 = vpop.permute.xlu0 %1682
          %1686 = vset.pattern.permute.xlu0 0
          %1687 = vperm.xlu0 %1686, %v1422
          %v1688 = vpop.permute.xlu0 %1687
          %1691 = vset.pattern.permute.xlu0 0
          %1692 = vperm.xlu0 %1691, %v1437
          %v1693 = vpop.permute.xlu0 %1692
          %1696 = vset.pattern.permute.xlu0 0
          %1697 = vperm.xlu0 %1696, %v1452
          %v1698 = vpop.permute.xlu0 %1697
          %1701 = vset.pattern.permute.xlu0 0
          %1702 = vperm.xlu0 %1701, %v1467
          %v1703 = vpop.permute.xlu0 %1702
          %1706 = vset.pattern.permute.xlu0 0
          %1707 = vperm.xlu0 %1706, %v1482
          %v1708 = vpop.permute.xlu0 %1707
          %1711 = vset.pattern.permute.xlu0 0
          %1712 = vperm.xlu0 %1711, %v1497
          %v1713 = vpop.permute.xlu0 %1712
          %1716 = vset.pattern.permute.xlu0 0
          %1717 = vperm.xlu0 %1716, %v1512
          %v1718 = vpop.permute.xlu0 %1717
          %1721 = vset.pattern.permute.xlu0 0
          %1722 = vperm.xlu0 %1721, %v1527
          %v1723 = vpop.permute.xlu0 %1722
          %1726 = vset.pattern.permute.xlu0 0
          %1727 = vperm.xlu0 %1726, %v1542
          %v1728 = vpop.permute.xlu0 %1727
          %1731 = vset.pattern.permute.xlu0 0
          %1732 = vperm.xlu0 %1731, %v1557
          %v1733 = vpop.permute.xlu0 %1732
          %v1735 = vmul.f32 %v1658, %v1592
          %v1736 = vmul.f32 %v1663, %v1595
          %v1737 = vmul.f32 %v1668, %v1598
          %v1738 = vmul.f32 %v1673, %v1601
          %v1739 = vmul.f32 %v1678, %v1604
          %v1740 = vmul.f32 %v1683, %v1607
          %v1741 = vmul.f32 %v1688, %v1610
          %v1742 = vmul.f32 %v1693, %v1613
          %v1743 = vmul.f32 %v1698, %v1616
          %v1744 = vmul.f32 %v1703, %v1619
          %v1745 = vmul.f32 %v1708, %v1622
          %v1746 = vmul.f32 %v1713, %v1625
          %v1747 = vmul.f32 %v1718, %v1628
          %v1748 = vmul.f32 %v1723, %v1631
          %v1749 = vmul.f32 %v1728, %v1634
          %v1750 = vmul.f32 %v1733, %v1637
          %1751 = vxpose.xlu0.b32.start [1/16] %v470, 128
          %1752 = vxpose.xlu0.b32.cont [2/16] %v471, 128
          %1753 = vxpose.xlu0.b32.cont [3/16] %v472, 128
          %1754 = vxpose.xlu0.b32.cont [4/16] %v473, 128
          %1755 = vxpose.xlu0.b32.cont [5/16] %v474, 128
          %1756 = vxpose.xlu0.b32.cont [6/16] %v475, 128
          %1757 = vxpose.xlu0.b32.cont [7/16] %v476, 128
          %1758 = vxpose.xlu0.b32.cont [8/16] %v477, 128
          %1759 = vxpose.xlu0.b32.cont [9/16] %v478, 128
          %1760 = vxpose.xlu0.b32.cont [10/16] %v479, 128
          %1761 = vxpose.xlu0.b32.cont [11/16] %v480, 128
          %1762 = vxpose.xlu0.b32.cont [12/16] %v481, 128
          %1763 = vxpose.xlu0.b32.cont [13/16] %v482, 128
          %1764 = vxpose.xlu0.b32.cont [14/16] %v483, 128
          %1765 = vxpose.xlu0.b32.cont [15/16] %v484, 128
          %1766 = vxpose.xlu0.b32.end [16/16] %v485, 128
          %v1767 = vpop.trf.xlu0
          %v1768 = vpop.trf.xlu0
          %v1769 = vpop.trf.xlu0
          %v1770 = vpop.trf.xlu0
          %v1771 = vpop.trf.xlu0
          %v1772 = vpop.trf.xlu0
          %v1773 = vpop.trf.xlu0
          %v1774 = vpop.trf.xlu0
          %v1775 = vpop.trf.xlu0
          %v1776 = vpop.trf.xlu0
          %v1777 = vpop.trf.xlu0
          %v1778 = vpop.trf.xlu0
          %v1779 = vpop.trf.xlu0
          %v1780 = vpop.trf.xlu0
          %v1781 = vpop.trf.xlu0
          %v1782 = vpop.trf.xlu0
          %1783 = vmatpush.msra.mxu0 %v1750
          %1784 = vmatpush.msra.mxu0 %v1749
          %1785 = vmatpush.msra.mxu0 %v1748
          %1786 = vmatpush.msra.mxu0 %v1747
          %1787 = vmatpush.msra.mxu0 %v1746
          %1788 = vmatpush.msra.mxu0 %v1745
          %1789 = vmatpush.msra.mxu0 %v1744
          %1790 = vmatpush.msra.mxu0 %v1743
          %1791 = vmatpush.msra.mxu0 %v1742
          %1792 = vmatpush.msra.mxu0 %v1741
          %1793 = vmatpush.msra.mxu0 %v1740
          %1794 = vmatpush.msra.mxu0 %v1739
          %1795 = vmatpush.msra.mxu0 %v1738
          %1796 = vmatpush.msra.mxu0 %v1737
          %1797 = vmatpush.msra.mxu0 %v1736
          %1798 = vmatpush.msra.mxu0 %v1735
          %1799 = vmatmul.f32.gmra.mxu0 %v1767
          %v1800 = vpop.f32.mrf.mxu0
          %v1801 = vadd.f32 0.0, %v1800
          %1802 = vmatmul.f32.gmra.mxu0 %v1768
          %v1803 = vpop.f32.mrf.mxu0
          %v1804 = vadd.f32 0.0, %v1803
          %1805 = vmatmul.f32.gmra.mxu0 %v1769
          %v1806 = vpop.f32.mrf.mxu0
          %v1807 = vadd.f32 0.0, %v1806
          %1808 = vmatmul.f32.gmra.mxu0 %v1770
          %v1809 = vpop.f32.mrf.mxu0
          %v1810 = vadd.f32 0.0, %v1809
          %1811 = vmatmul.f32.gmra.mxu0 %v1771
          %v1812 = vpop.f32.mrf.mxu0
          %v1813 = vadd.f32 0.0, %v1812
          %1814 = vmatmul.f32.gmra.mxu0 %v1772
          %v1815 = vpop.f32.mrf.mxu0
          %v1816 = vadd.f32 0.0, %v1815
          %1817 = vmatmul.f32.gmra.mxu0 %v1773
          %v1818 = vpop.f32.mrf.mxu0
          %v1819 = vadd.f32 0.0, %v1818
          %1820 = vmatmul.f32.gmra.mxu0 %v1774
          %v1821 = vpop.f32.mrf.mxu0
          %v1822 = vadd.f32 0.0, %v1821
          %1823 = vmatmul.f32.gmra.mxu0 %v1775
          %v1824 = vpop.f32.mrf.mxu0
          %v1825 = vadd.f32 0.0, %v1824
          %1826 = vmatmul.f32.gmra.mxu0 %v1776
          %v1827 = vpop.f32.mrf.mxu0
          %v1828 = vadd.f32 0.0, %v1827
          %1829 = vmatmul.f32.gmra.mxu0 %v1777
          %v1830 = vpop.f32.mrf.mxu0
          %v1831 = vadd.f32 0.0, %v1830
          %1832 = vmatmul.f32.gmra.mxu0 %v1778
          %v1833 = vpop.f32.mrf.mxu0
          %v1834 = vadd.f32 0.0, %v1833
          %1835 = vmatmul.f32.gmra.mxu0 %v1779
          %v1836 = vpop.f32.mrf.mxu0
          %v1837 = vadd.f32 0.0, %v1836
          %1838 = vmatmul.f32.gmra.mxu0 %v1780
          %v1839 = vpop.f32.mrf.mxu0
          %v1840 = vadd.f32 0.0, %v1839
          %1841 = vmatmul.f32.gmra.mxu0 %v1781
          %v1842 = vpop.f32.mrf.mxu0
          %v1843 = vadd.f32 0.0, %v1842
          %1844 = vmatmul.f32.gmra.mxu0 %v1782
          %v1845 = vpop.f32.mrf.mxu0
          %v1846 = vadd.f32 0.0, %v1845
          %1847 = vdwg.mxu0
          %v1848 = vadd.f32 %v1639, %v1801
          %v1849 = vadd.f32 %v1640, %v1804
          %v1850 = vadd.f32 %v1641, %v1807
          %v1851 = vadd.f32 %v1642, %v1810
          %v1852 = vadd.f32 %v1643, %v1813
          %v1853 = vadd.f32 %v1644, %v1816
          %v1854 = vadd.f32 %v1645, %v1819
          %v1855 = vadd.f32 %v1646, %v1822
          %v1856 = vadd.f32 %v1647, %v1825
          %v1857 = vadd.f32 %v1648, %v1828
          %v1858 = vadd.f32 %v1649, %v1831
          %v1859 = vadd.f32 %v1650, %v1834
          %v1860 = vadd.f32 %v1651, %v1837
          %v1861 = vadd.f32 %v1652, %v1840
          %v1862 = vadd.f32 %v1653, %v1843
          %v1863 = vadd.f32 %v1654, %v1846
          %1864 = vst [vmem:[#allocation4] sm:$0xff] %v1848
          %1865 = vst [vmem:[#allocation4 + $0x8] sm:$0xff] %v1849
          %1866 = vst [vmem:[#allocation4 + $0x10] sm:$0xff] %v1850
          %1867 = vst [vmem:[#allocation4 + $0x18] sm:$0xff] %v1851
          %1868 = vst [vmem:[#allocation4 + $0x20] sm:$0xff] %v1852
          %1869 = vst [vmem:[#allocation4 + $0x28] sm:$0xff] %v1853
          %1870 = vst [vmem:[#allocation4 + $0x30] sm:$0xff] %v1854
          %1871 = vst [vmem:[#allocation4 + $0x38] sm:$0xff] %v1855
          %1872 = vst [vmem:[#allocation4 + $0x40] sm:$0xff] %v1856
          %1873 = vst [vmem:[#allocation4 + $0x48] sm:$0xff] %v1857
          %1874 = vst [vmem:[#allocation4 + $0x50] sm:$0xff] %v1858
          %1875 = vst [vmem:[#allocation4 + $0x58] sm:$0xff] %v1859
          %1876 = vst [vmem:[#allocation4 + $0x60] sm:$0xff] %v1860
          %1877 = vst [vmem:[#allocation4 + $0x68] sm:$0xff] %v1861
          %1878 = vst [vmem:[#allocation4 + $0x70] sm:$0xff] %v1862
          %1879 = vst [vmem:[#allocation4 + $0x78] sm:$0xff] %v1863
        $region52: #{tpu_custom_call.1} parent=35 // pred_fallthru
          _
        %p1880 = pnand %p1133, %p221
        %p1881 = pneg %p1880
        // Predicated region
        $region53: #{tpu_custom_call.1} parent=35 // pred_check
          _
        $region54: #{tpu_custom_call.1} parent=35 // pred_check_branch
          %1883 = sbr.rel (%p1880) target = $region56
        $region55: #{tpu_custom_call.1} parent=35 // pred_region
          %v1884 = vld [vmem:[#allocation4] sm:$0xff]
          %v1885 = vld [vmem:[#allocation4 + $0x8] sm:$0xff]
          %v1886 = vld [vmem:[#allocation4 + $0x10] sm:$0xff]
          %v1887 = vld [vmem:[#allocation4 + $0x18] sm:$0xff]
          %v1888 = vld [vmem:[#allocation4 + $0x20] sm:$0xff]
          %v1889 = vld [vmem:[#allocation4 + $0x28] sm:$0xff]
          %v1890 = vld [vmem:[#allocation4 + $0x30] sm:$0xff]
          %v1891 = vld [vmem:[#allocation4 + $0x38] sm:$0xff]
          %v1892 = vld [vmem:[#allocation4 + $0x40] sm:$0xff]
          %v1893 = vld [vmem:[#allocation4 + $0x48] sm:$0xff]
          %v1894 = vld [vmem:[#allocation4 + $0x50] sm:$0xff]
          %v1895 = vld [vmem:[#allocation4 + $0x58] sm:$0xff]
          %v1896 = vld [vmem:[#allocation4 + $0x60] sm:$0xff]
          %v1897 = vld [vmem:[#allocation4 + $0x68] sm:$0xff]
          %v1898 = vld [vmem:[#allocation4 + $0x70] sm:$0xff]
          %v1899 = vld [vmem:[#allocation4 + $0x78] sm:$0xff]
          %v1900 = vmax.f32 %v1884, 0.0
          %v1901 = vmax.f32 %v1885, 0.0
          %v1902 = vmax.f32 %v1886, 0.0
          %v1903 = vmax.f32 %v1887, 0.0
          %v1904 = vmax.f32 %v1888, 0.0
          %v1905 = vmax.f32 %v1889, 0.0
          %v1906 = vmax.f32 %v1890, 0.0
          %v1907 = vmax.f32 %v1891, 0.0
          %v1908 = vmax.f32 %v1892, 0.0
          %v1909 = vmax.f32 %v1893, 0.0
          %v1910 = vmax.f32 %v1894, 0.0
          %v1911 = vmax.f32 %v1895, 0.0
          %v1912 = vmax.f32 %v1896, 0.0
          %v1913 = vmax.f32 %v1897, 0.0
          %v1914 = vmax.f32 %v1898, 0.0
          %v1915 = vmax.f32 %v1899, 0.0
          %1916 = vst [vmem:[#allocation5] sm:$0xff] %v1900
          %1917 = vst [vmem:[#allocation5 + $0x8] sm:$0xff] %v1901
          %1918 = vst [vmem:[#allocation5 + $0x10] sm:$0xff] %v1902
          %1919 = vst [vmem:[#allocation5 + $0x18] sm:$0xff] %v1903
          %1920 = vst [vmem:[#allocation5 + $0x20] sm:$0xff] %v1904
          %1921 = vst [vmem:[#allocation5 + $0x28] sm:$0xff] %v1905
          %1922 = vst [vmem:[#allocation5 + $0x30] sm:$0xff] %v1906
          %1923 = vst [vmem:[#allocation5 + $0x38] sm:$0xff] %v1907
          %1924 = vst [vmem:[#allocation5 + $0x40] sm:$0xff] %v1908
          %1925 = vst [vmem:[#allocation5 + $0x48] sm:$0xff] %v1909
          %1926 = vst [vmem:[#allocation5 + $0x50] sm:$0xff] %v1910
          %1927 = vst [vmem:[#allocation5 + $0x58] sm:$0xff] %v1911
          %1928 = vst [vmem:[#allocation5 + $0x60] sm:$0xff] %v1912
          %1929 = vst [vmem:[#allocation5 + $0x68] sm:$0xff] %v1913
          %1930 = vst [vmem:[#allocation5 + $0x70] sm:$0xff] %v1914
          %1931 = vst [vmem:[#allocation5 + $0x78] sm:$0xff] %v1915
        $region56: #{tpu_custom_call.1} parent=35 // pred_fallthru
          _
        // Predicated region
        $region57: #{tpu_custom_call.1} parent=35 // pred_check
          %p1932 = pneg %p135
        $region58: #{tpu_custom_call.1} parent=35 // pred_check_branch
          %1934 = sbr.rel (%p1932) target = $region60
        $region59: #{tpu_custom_call.1} parent=35 // pred_region
          %1936 = vsyncadd [#allocation6], 0
          %s1937 = sshll.u32 [#allocation5], 4
          %s1938 = int_to_ptr.vmem [resolvable:$true] %s1937
          %s1939 = sshll.u32 %s4, 4
          %s1940 = int_to_ptr.hbm [resolvable:$true] %s1939
          %1945 = dma.vmem_to_hbm [thread:$0]  %s1938, 2048, %s1940, [#allocation6], 128, 128, 8
        $region60: #{tpu_custom_call.1} parent=35 // pred_fallthru
          _
        // Predicated region
        $region61: #{tpu_custom_call.1} parent=35 // pred_check
          %p1946 = pneg %p135
        $region62: #{tpu_custom_call.1} parent=35 // pred_check_branch
          %1948 = sbr.rel (%p1946) target = $region64
        $region63: #{tpu_custom_call.1} parent=35 // pred_region
          %1950 = dma.done [#allocation6], 2048
        $region64: #{tpu_custom_call.1} parent=35 // pred_fallthru
          _
      $region36: #{tpu_custom_call.1} parent=5 // pred_fallthru
        _
      %p1951 = scmp.le.s32.totalorder 2, %s11
      // Predicated region
      $region65: #{tpu_custom_call.1} parent=5 // pred_check
        %p1952 = pneg %p1951
      $region66: #{tpu_custom_call.1} parent=5 // pred_check_branch
        %1954 = sbr.rel (%p1952) target = $region68
      $region67: #{tpu_custom_call.1} parent=5 // pred_region
        %s1955 = ssub.s32 %s11, 2
      $region68: #{tpu_custom_call.1} parent=5 // pred_fallthru
        _
    $region6: #{tpu_custom_call.1} parent=1 // loop_footer
      %s15 = sadd.s32 1, %s11
    $region7: #{tpu_custom_call.1} parent=1 // loop_footer_branch
      %10 = sbr.rel target = $region3
    $region8: #{tpu_custom_call.1} parent=1 // loop_exit
      _
    %1956 = vsyncpa [#allocation6], 1
    %s1957 = scalar_lea.sflag [#allocation6], 1
    %1958 = vsyncpa %s1957, 1

</llo_original>
